<compile_context>
chip_gen: v7x
topology: tpu7x:2x2x1
jax: 0.10.0
libtpu: 0.0.40
codegen_flags: <defaults>
</compile_context>

<pallas_src>
import functools
import math

import jax
import jax.numpy as jnp
from jax import lax
from jax.experimental import pallas as pl
from jax.experimental.pallas import tpu as pltpu


# ----------------------------------------------------------------------------
# Hardware-aware knobs
# ----------------------------------------------------------------------------
def _device_kind():
    try:
        return jax.devices()[0].device_kind.lower()
    except Exception:
        return ""


@functools.lru_cache(maxsize=None)
def _vmem_limit_bytes():
    # ~20% headroom under physical VMEM (v7x: 64 MiB/TC, v5e/v6e: 128 MiB).
    try:
        cap = int(pltpu.get_tpu_info().vmem_capacity_bytes)
    except Exception:
        cap = 64 * 1024 * 1024 if "7" in _device_kind() else 128 * 1024 * 1024
    return int(cap * 4 // 5)


def _compiler_params(dims):
    return pltpu.CompilerParams(dimension_semantics=dims,
                                vmem_limit_bytes=_vmem_limit_bytes())


@functools.lru_cache(maxsize=None)
def _single_buffer_ok():
    """Probe whether pipeline_mode=pl.Buffered(1) lowers on this backend."""
    def _k(x_ref, o_ref):
        o_ref[...] = x_ref[...] + 1.0
    try:
        spec = pl.BlockSpec((8, 128), lambda i: (0, 0),
                            pipeline_mode=pl.Buffered(1))
        f = pl.pallas_call(
            _k,
            out_shape=jax.ShapeDtypeStruct((8, 128), jnp.float32),
            grid=(2,),
            in_specs=[spec],
            out_specs=pl.BlockSpec((8, 128), lambda i: (0, 0)),
        )
        jax.block_until_ready(f(jnp.zeros((8, 128), jnp.float32)))
        return True
    except Exception:
        return False


def _const_spec(shape, grid_rank):
    """BlockSpec for a grid-invariant weight; single-buffered when supported."""
    nd = len(shape)
    if grid_rank == 2:
        idx = lambda b, i, _nd=nd: (0,) * _nd
    else:
        idx = lambda b, i, j, _nd=nd: (0,) * _nd
    if _single_buffer_ok():
        return pl.BlockSpec(shape, idx, pipeline_mode=pl.Buffered(1))
    return pl.BlockSpec(shape, idx)


def _pick_tile(n, candidates):
    for c in candidates:
        if c <= n and n % c == 0:
            return c
    return n


def _select_tiles(S, V):
    kind = _device_kind()
    wide_mxu = ("v6" in kind) or ("7" in kind)        # 256-wide MXU on v6e/v7x
    tq = _pick_tile(S, (128, 64, 32, 16, 8))
    tk = _pick_tile(S, ((256, 128, 64, 32, 16, 8) if wide_mxu
                        else (128, 64, 32, 16, 8)))
    big_vmem = "v6" in kind                            # 128 MiB VMEM on v6e
    tv = _pick_tile(V, ((1024, 512, 256, 128) if big_vmem
                        else (512, 256, 128)))
    return tq, tk, tv


# ----------------------------------------------------------------------------
# Kernels
# ----------------------------------------------------------------------------
def qkv_kernel(x_ref, wqkv_ref, bqkv_ref, q_ref, k_ref, v_ref):
    """Fused Q/K/V projection for one (batch, seq-tile); head-major outputs.

    The 1/sqrt(d_k) attention scale is pre-folded into the Q slice of wqkv/bqkv.
    """
    _, h, tq, d_k = q_ref.shape
    d_model = h * d_k
    x = x_ref[0]                                                  # (TQ, D) bf16
    qkv = jnp.dot(x, wqkv_ref[...],
                  preferred_element_type=jnp.float32) + bqkv_ref[0]   # (TQ, 3D)
    for hi in range(h):                      # static layout split only (no matmuls)
        lo = hi * d_k
        q_ref[0, hi] = qkv[:, lo:lo + d_k].astype(q_ref.dtype)
        k_ref[0, hi] = qkv[:, d_model + lo:d_model + lo + d_k].astype(k_ref.dtype)
        v_ref[0, hi] = qkv[:, 2 * d_model + lo:
                           2 * d_model + lo + d_k].astype(v_ref.dtype)


def attn_layer_kernel(x_ref, q_ref, k_ref, v_ref,
                      wo_ref, bo_ref, g1_ref, be1_ref,
                      w1_ref, b1_ref, w2_ref, b2_ref,
                      g2_ref, be2_ref,
                      o_ref, m_sc, l_sc, acc_sc):
    """Causal flash attention fused with out-proj + residual + LN1 + FFN + LN2.

    Grid is (batch, q-tile, kv-tile); the epilogue runs on the last kv tile so
    the per-layer attention context never round-trips through HBM.
    """
    _, h, tq, d_k = q_ref.shape
    tk = k_ref.shape[2]

    j = pl.program_id(2)
    nk = pl.num_programs(2)
    q_start = pl.program_id(1) * tq
    kv_start = j * tk

    @pl.when(j == 0)
    def _init():
        m_sc[...] = jnp.full_like(m_sc, -jnp.inf)
        l_sc[...] = jnp.zeros_like(l_sc)
        acc_sc[...] = jnp.zeros_like(acc_sc)

    # Fully-masked KV tiles: the index_map clamps their DMA to the diagonal
    # block (no new HBM traffic) and this guard skips their compute entirely.
    @pl.when(kv_start <= q_start + tq - 1)
    def _compute():
        s = jnp.einsum("hqd,hkd->hqk", q_ref[0], k_ref[0],
                       preferred_element_type=jnp.float32)        # (h, TQ, TK)

        # Causal mask from one 2-D iota pair, broadcast over heads; it only
        # bites on tiles that straddle the diagonal.
        needs_mask = kv_start + tk - 1 > q_start
        rows = q_start + lax.broadcasted_iota(jnp.int32, (tq, tk), 0)
        cols = kv_start + lax.broadcasted_iota(jnp.int32, (tq, tk), 1)
        keep = jnp.logical_or(cols <= rows, jnp.logical_not(needs_mask))
        s = jnp.where(keep[None, :, :], s, -1e30)

        m_prev = m_sc[...]
        m_new = jnp.maximum(m_prev, jnp.max(s, axis=-1, keepdims=True))
        alpha = jnp.exp(m_prev - m_new)
        p = jnp.exp(s - m_new)
        l_sc[...] = alpha * l_sc[...] + jnp.sum(p, axis=-1, keepdims=True)
        acc_sc[...] = alpha * acc_sc[...] + jnp.einsum(
            "hqk,hkd->hqd", p.astype(jnp.bfloat16), v_ref[0],
            preferred_element_type=jnp.float32)
        m_sc[...] = m_new

    @pl.when(j == nk - 1)
    def _finalize():
        inv_l = pl.reciprocal(l_sc[...], approx=True)
        ctx = (acc_sc[...] * inv_l).astype(jnp.bfloat16)          # (h, TQ, d_k)

        # Per-head output projection: each (TQ, d_k) @ (d_k, D) feeds the MXU
        # straight from the accumulator (no head-concat lane relayout).
        d_model = h * d_k
        attn = jnp.zeros((tq, d_model), jnp.float32)
        for hi in range(h):
            attn = attn + jnp.dot(ctx[hi], wo_ref[hi],
                                  preferred_element_type=jnp.float32)
        attn = attn + bo_ref[0]

        x = x_ref[0].astype(jnp.float32)                          # f32 LN math
        y = x + attn
        mu = jnp.mean(y, axis=-1, keepdims=True)
        var = jnp.mean(jnp.square(y - mu), axis=-1, keepdims=True)
        y = (y - mu) * lax.rsqrt(var + 1e-5) * g1_ref[0] + be1_ref[0]

        ff = jnp.dot(y.astype(jnp.bfloat16), w1_ref[...],
                     preferred_element_type=jnp.float32) + b1_ref[0]
        ff = jnp.maximum(ff, 0.0)
        ff = jnp.dot(ff.astype(jnp.bfloat16), w2_ref[...],
                     preferred_element_type=jnp.float32) + b2_ref[0]

        z = y + ff
        mu2 = jnp.mean(z, axis=-1, keepdims=True)
        var2 = jnp.mean(jnp.square(z - mu2), axis=-1, keepdims=True)
        z = (z - mu2) * lax.rsqrt(var2 + 1e-5) * g2_ref[0] + be2_ref[0]

        o_ref[0] = z.astype(o_ref.dtype)


def output_proj_kernel(x_ref, w_ref, b_ref, o_ref):
    """Final feature map on a (TQ, D) x (D, TV) tile (lane-dense vocab stream)."""
    x = x_ref[0]                                                  # (TQ, D) bf16
    o_ref[0] = (jnp.dot(x, w_ref[...], preferred_element_type=jnp.float32)
                + b_ref[0]).astype(o_ref.dtype)


# ----------------------------------------------------------------------------
# Pallas wrappers
# ----------------------------------------------------------------------------
def run_qkv(x, lp, h, tq):
    B, S, D = x.shape
    d_k = D // h
    nq = S // tq
    x_spec = pl.BlockSpec((1, tq, D), lambda b, i: (b, i, 0))
    head_spec = pl.BlockSpec((1, h, tq, d_k), lambda b, i: (b, 0, i, 0))
    out = jax.ShapeDtypeStruct((B, h, S, d_k), jnp.bfloat16)
    return pl.pallas_call(
        qkv_kernel,
        out_shape=(out, out, out),
        grid_spec=pltpu.PrefetchScalarGridSpec(
            num_scalar_prefetch=0,
            grid=(B, nq),
            in_specs=[x_spec,
                      _const_spec(lp["wqkv"].shape, 2),
                      _const_spec(lp["bqkv"].shape, 2)],
            out_specs=(head_spec, head_spec, head_spec),
        ),
        compiler_params=_compiler_params(("parallel", "parallel")),
    )(x, lp["wqkv"], lp["bqkv"])


def run_attn_layer(x, q, k, v, lp, tq, tk):
    B, h, S, d_k = q.shape
    D = h * d_k
    nq, nk = S // tq, S // tk

    def last_kv(i):                     # diagonal kv block for query tile i
        return (i * tq + tq - 1) // tk

    x_spec = pl.BlockSpec((1, tq, D), lambda b, i, j: (b, i, 0))
    q_spec = pl.BlockSpec((1, h, tq, d_k), lambda b, i, j: (b, 0, i, 0))
    # Clamp the KV block index past the causal diagonal: fully-masked tiles
    # re-use the diagonal block (no new DMA); their compute is skipped in-kernel.
    kv_spec = pl.BlockSpec(
        (1, h, tk, d_k),
        lambda b, i, j: (b, 0, jnp.minimum(j, last_kv(i)), 0))

    names = ("wo", "bo", "g1", "be1", "w1", "b1", "w2", "b2", "g2", "be2")
    weights = [lp[n] for n in names]
    in_specs = ([x_spec, q_spec, kv_spec, kv_spec]
                + [_const_spec(w.shape, 3) for w in weights])

    return pl.pallas_call(
        attn_layer_kernel,
        out_shape=jax.ShapeDtypeStruct((B, S, D), jnp.bfloat16),
        grid_spec=pltpu.PrefetchScalarGridSpec(
            num_scalar_prefetch=0,
            grid=(B, nq, nk),
            in_specs=in_specs,
            out_specs=pl.BlockSpec((1, tq, D), lambda b, i, j: (b, i, 0)),
            scratch_shapes=[pltpu.VMEM((h, tq, 1), jnp.float32),     # m
                            pltpu.VMEM((h, tq, 1), jnp.float32),     # l
                            pltpu.VMEM((h, tq, d_k), jnp.float32)],  # acc
        ),
        compiler_params=_compiler_params(("parallel", "parallel", "arbitrary")),
    )(x, q, k, v, *weights)


def run_output_proj(x, w, b, tq, tv):
    B, S, D = x.shape
    V = w.shape[1]
    nq, nv = S // tq, V // tv
    return pl.pallas_call(
        output_proj_kernel,
        out_shape=jax.ShapeDtypeStruct((B, S, V), jnp.float32),
        grid_spec=pltpu.PrefetchScalarGridSpec(
            num_scalar_prefetch=0,
            grid=(B, nq, nv),
            in_specs=[pl.BlockSpec((1, tq, D), lambda b, i, j: (b, i, 0)),
                      pl.BlockSpec((D, tv), lambda b, i, j: (0, j)),
                      pl.BlockSpec((1, tv), lambda b, i, j: (0, j))],
            out_specs=pl.BlockSpec((1, tq, tv), lambda b, i, j: (b, i, j)),
        ),
        compiler_params=_compiler_params(("parallel", "parallel", "parallel")),
    )(x, w, b)


# ----------------------------------------------------------------------------
# Parameter construction + full forward
# ----------------------------------------------------------------------------
def init_params(key, vocab_size, h, d_model, d_ff, num_layers):
    assert d_model % h == 0
    d_k = d_model // h
    scale = 1.0 / math.sqrt(d_k)

    def dense(k, fan_in, fan_out):
        w = jax.random.normal(k, (fan_in, fan_out), jnp.float32) * 0.02
        return w, jnp.zeros((1, fan_out), jnp.float32)

    keys = jax.random.split(key, 2 + 6 * num_layers)
    params = {"emb": jax.random.normal(keys[0], (vocab_size, d_model),
                                       jnp.float32) * 0.02}
    layers = []
    for li in range(num_layers):
        kq, kk, kv, ko, k1, k2 = keys[2 + 6 * li: 2 + 6 * (li + 1)]
        wq, bq = dense(kq, d_model, d_model)
        wk, bk = dense(kk, d_model, d_model)
        wv, bv = dense(kv, d_model, d_model)
        wo, bo = dense(ko, d_model, d_model)
        w1, b1 = dense(k1, d_model, d_ff)
        w2, b2 = dense(k2, d_ff, d_model)
        lp = {
            # fold 1/sqrt(d_k) into the Q projection; fuse q/k/v into one weight
            "wqkv": jnp.concatenate([wq * scale, wk, wv],
                                    axis=1).astype(jnp.bfloat16),     # (D, 3D)
            "bqkv": jnp.concatenate([bq * scale, bk, bv], axis=1),    # (1, 3D)
            # output projection viewed head-major: (h, d_k, D)
            "wo": wo.reshape(h, d_k, d_model).astype(jnp.bfloat16),
            "bo": bo,
            "w1": w1.astype(jnp.bfloat16), "b1": b1,
            "w2": w2.astype(jnp.bfloat16), "b2": b2,
            "g1": jnp.ones((1, d_model), jnp.float32),
            "be1": jnp.zeros((1, d_model), jnp.float32),
            "g2": jnp.ones((1, d_model), jnp.float32),
            "be2": jnp.zeros((1, d_model), jnp.float32),
        }
        layers.append(lp)
    params["layers"] = layers
    wf, bf = dense(keys[1], d_model, vocab_size)
    params["wf"] = wf.astype(jnp.bfloat16)
    params["bf"] = bf
    return params


def sinusoidal_pe(seq_len, d_model):
    pos = jnp.arange(seq_len, dtype=jnp.float32)[:, None]            # (S, 1)
    i = jnp.arange(0, d_model, 2, dtype=jnp.float32)[None, :]         # (1, D/2)
    angle = pos / jnp.power(10000.0, i / d_model)
    pe = jnp.zeros((seq_len, d_model), jnp.float32)
    pe = pe.at[:, 0::2].set(jnp.sin(angle))
    pe = pe.at[:, 1::2].set(jnp.cos(angle))
    return pe


def transformer_forward(tokens, params, h, d_model):
    assert tokens.ndim == 2
    assert d_model % h == 0
    B, S = tokens.shape
    # PositionAwareEmbedding (glue: gather + PE add in plain JAX), then keep the
    # residual stream bf16 between pallas_calls (halves activation HBM traffic).
    x = params["emb"][tokens] * jnp.sqrt(jnp.float32(d_model))        # (B, S, D)
    x = (x + sinusoidal_pe(S, d_model)[None, :, :]).astype(jnp.bfloat16)

    V = params["wf"].shape[1]
    tq, tk, tv = _select_tiles(S, V)

    for lp in params["layers"]:
        q, k, v = run_qkv(x, lp, h, tq)
        x = run_attn_layer(x, q, k, v, lp, tq, tk)
    assert x.shape == (B, S, d_model)

    out = run_output_proj(x, params["wf"], params["bf"], tq, tv)
    assert out.shape == (B, S, V)
    return out


# ----------------------------------------------------------------------------
if __name__ == "__main__":
    # Small lane-friendly demo shapes: d_k = 128 (lane-dense head slices), and
    # enough sequence tiles that the causal DMA clamp / tile skip and the
    # online-softmax recurrence are actually exercised.
    vocab_size = 1024
    h = 2
    d_model = 256
    d_ff = 512
    num_attention_layers = 2
    batch, seq = 2, 512

    key = jax.random.PRNGKey(0)
    kp, kx = jax.random.split(key)
    params = init_params(kp, vocab_size, h, d_model, d_ff, num_attention_layers)
    tokens = jax.random.randint(kx, (batch, seq), 0, vocab_size, dtype=jnp.int32)

    logits = transformer_forward(tokens, params, h, d_model)
    logits = jax.block_until_ready(logits)

    assert logits.shape == (batch, seq, vocab_size)
    assert bool(jnp.all(jnp.isfinite(logits)))
    print("KERNEL_OK")
</pallas_src>

<mosaic_0001>
module attributes {stable_mosaic.version = 11 : i64} {
  func.func @_k(%arg0: i32, %arg1: memref<8x128xf32, #tpu.memory_space<vmem>>, %arg2: memref<8x128xf32, #tpu.memory_space<vmem>>) attributes {dimension_semantics = [#tpu.dimension_semantics<arbitrary>], iteration_bounds = array<i64: 2>, scalar_prefetch = 0 : i64, scratch_operands = 0 : i64, tpu.core_type = #tpu.core_type<tc>, window_params = [{pipeline_mode = #tpu.pipeline_mode<synchronous>, transform_indices = @transform_0, window_bounds = array<i64: 8, 128>}, {pipeline_mode = #tpu.pipeline_mode<synchronous>, transform_indices = @transform_1, window_bounds = array<i64: 8, 128>}]} {
    %c0 = arith.constant 0 : index
    %c0_0 = arith.constant 0 : index
    %0 = vector.load %arg1[%c0, %c0_0] : memref<8x128xf32, #tpu.memory_space<vmem>>, vector<8x128xf32>
    %cst = arith.constant 1.000000e+00 : f32
    %1 = vector.broadcast %cst : f32 to vector<8x128xf32>
    %2 = arith.addf %0, %1 : vector<8x128xf32>
    %c0_1 = arith.constant 0 : index
    %c0_2 = arith.constant 0 : index
    %3 = vector.load %arg2[%c0_1, %c0_2] : memref<8x128xf32, #tpu.memory_space<vmem>>, vector<8x128xf32>
    tpu.vector_store %arg2[%c0_1, %c0_2], %2 {strides = array<i32>} : memref<8x128xf32, #tpu.memory_space<vmem>>, vector<8x128xf32>,
    return
  }
  func.func @transform_0(%arg0: i32) -> (i32, i32) {
    %c0_i32 = arith.constant 0 : i32
    %c0_i32_0 = arith.constant 0 : i32
    %c0_i32_1 = arith.constant 0 : i32
    return %c0_i32, %c0_i32_0 : i32, i32
  }
  func.func @transform_1(%arg0: i32) -> (i32, i32) {
    %c0_i32 = arith.constant 0 : i32
    %c0_i32_0 = arith.constant 0 : i32
    %c0_i32_1 = arith.constant 0 : i32
    return %c0_i32, %c0_i32_0 : i32, i32
  }
}

module attributes {stable_mosaic.version = 11 : i64} {
  func.func @qkv_kernel(%arg0: i32, %arg1: i32, %arg2: memref<1x128x256xbf16, #tpu.memory_space<vmem>>, %arg3: memref<256x768xbf16, #tpu.memory_space<vmem>>, %arg4: memref<1x768xf32, #tpu.memory_space<vmem>>, %arg5: memref<1x2x128x128xbf16, #tpu.memory_space<vmem>>, %arg6: memref<1x2x128x128xbf16, #tpu.memory_space<vmem>>, %arg7: memref<1x2x128x128xbf16, #tpu.memory_space<vmem>>) attributes {dimension_semantics = [#tpu.dimension_semantics<parallel>, #tpu.dimension_semantics<parallel>], iteration_bounds = array<i64: 2, 4>, scalar_prefetch = 0 : i64, scratch_operands = 0 : i64, tpu.core_type = #tpu.core_type<tc>, window_params = [{transform_indices = @transform_0, window_bounds = array<i64: 1, 128, 256>}, {pipeline_mode = #tpu.pipeline_mode<synchronous>, transform_indices = @transform_1, window_bounds = array<i64: 256, 768>}, {pipeline_mode = #tpu.pipeline_mode<synchronous>, transform_indices = @transform_2, window_bounds = array<i64: 1, 768>}, {transform_indices = @transform_3, window_bounds = array<i64: 1, 2, 128, 128>}, {transform_indices = @transform_4, window_bounds = array<i64: 1, 2, 128, 128>}, {transform_indices = @transform_5, window_bounds = array<i64: 1, 2, 128, 128>}]} {
    %c0 = arith.constant 0 : index
    %c0_0 = arith.constant 0 : index
    %c0_1 = arith.constant 0 : index
    %0 = vector.load %arg2[%c0, %c0_0, %c0_1] : memref<1x128x256xbf16, #tpu.memory_space<vmem>>, vector<1x128x256xbf16>
    %1 = vector.shape_cast %0 : vector<1x128x256xbf16> to vector<128x256xbf16>
    %c0_2 = arith.constant 0 : index
    %c0_3 = arith.constant 0 : index
    %2 = vector.load %arg3[%c0_2, %c0_3] : memref<256x768xbf16, #tpu.memory_space<vmem>>, vector<256x768xbf16>
    %cst = arith.constant dense<0.000000e+00> : vector<128x768xf32>
    %3 = tpu.matmul %1, %2, %cst {dimension_numbers = #tpu.dot_dimension_numbers<[1], [0], [0], [1], [0, 0, 1, 1], [], []>} : vector<128x256xbf16>, vector<256x768xbf16>, vector<128x768xf32> -> vector<128x768xf32>
    %c0_4 = arith.constant 0 : index
    %c0_5 = arith.constant 0 : index
    %4 = vector.load %arg4[%c0_4, %c0_5] : memref<1x768xf32, #tpu.memory_space<vmem>>, vector<1x768xf32>
    %5 = vector.shape_cast %4 : vector<1x768xf32> to vector<768xf32>
    %6 = vector.shape_cast %5 : vector<768xf32> to vector<1x768xf32>
    %7 = vector.broadcast %6 : vector<1x768xf32> to vector<128x768xf32>
    %8 = arith.addf %3, %7 : vector<128x768xf32>
    %9 = vector.extract_strided_slice %8 {offsets = [0, 0], sizes = [128, 128], strides = [1, 1]} : vector<128x768xf32> to vector<128x128xf32>
    %10 = arith.truncf %9 : vector<128x128xf32> to vector<128x128xbf16>
    %c0_6 = arith.constant 0 : index
    %c0_7 = arith.constant 0 : index
    %c0_8 = arith.constant 0 : index
    %c0_9 = arith.constant 0 : index
    %11 = vector.load %arg5[%c0_6, %c0_7, %c0_8, %c0_9] : memref<1x2x128x128xbf16, #tpu.memory_space<vmem>>, vector<1x1x128x128xbf16>
    %12 = vector.shape_cast %11 : vector<1x1x128x128xbf16> to vector<128x128xbf16>
    %13 = vector.shape_cast %10 : vector<128x128xbf16> to vector<1x1x128x128xbf16>
    tpu.vector_store %arg5[%c0_6, %c0_7, %c0_8, %c0_9], %13 {strides = array<i32>} : memref<1x2x128x128xbf16, #tpu.memory_space<vmem>>, vector<1x1x128x128xbf16>,
    %14 = vector.extract_strided_slice %8 {offsets = [0, 256], sizes = [128, 128], strides = [1, 1]} : vector<128x768xf32> to vector<128x128xf32>
    %15 = arith.truncf %14 : vector<128x128xf32> to vector<128x128xbf16>
    %c0_10 = arith.constant 0 : index
    %c0_11 = arith.constant 0 : index
    %c0_12 = arith.constant 0 : index
    %c0_13 = arith.constant 0 : index
    %16 = vector.load %arg6[%c0_10, %c0_11, %c0_12, %c0_13] : memref<1x2x128x128xbf16, #tpu.memory_space<vmem>>, vector<1x1x128x128xbf16>
    %17 = vector.shape_cast %16 : vector<1x1x128x128xbf16> to vector<128x128xbf16>
    %18 = vector.shape_cast %15 : vector<128x128xbf16> to vector<1x1x128x128xbf16>
    tpu.vector_store %arg6[%c0_10, %c0_11, %c0_12, %c0_13], %18 {strides = array<i32>} : memref<1x2x128x128xbf16, #tpu.memory_space<vmem>>, vector<1x1x128x128xbf16>,
    %19 = vector.extract_strided_slice %8 {offsets = [0, 512], sizes = [128, 128], strides = [1, 1]} : vector<128x768xf32> to vector<128x128xf32>
    %20 = arith.truncf %19 : vector<128x128xf32> to vector<128x128xbf16>
    %c0_14 = arith.constant 0 : index
    %c0_15 = arith.constant 0 : index
    %c0_16 = arith.constant 0 : index
    %c0_17 = arith.constant 0 : index
    %21 = vector.load %arg7[%c0_14, %c0_15, %c0_16, %c0_17] : memref<1x2x128x128xbf16, #tpu.memory_space<vmem>>, vector<1x1x128x128xbf16>
    %22 = vector.shape_cast %21 : vector<1x1x128x128xbf16> to vector<128x128xbf16>
    %23 = vector.shape_cast %20 : vector<128x128xbf16> to vector<1x1x128x128xbf16>
    tpu.vector_store %arg7[%c0_14, %c0_15, %c0_16, %c0_17], %23 {strides = array<i32>} : memref<1x2x128x128xbf16, #tpu.memory_space<vmem>>, vector<1x1x128x128xbf16>,
    %24 = vector.extract_strided_slice %8 {offsets = [0, 128], sizes = [128, 128], strides = [1, 1]} : vector<128x768xf32> to vector<128x128xf32>
    %25 = arith.truncf %24 : vector<128x128xf32> to vector<128x128xbf16>
    %c0_18 = arith.constant 0 : index
    %c1 = arith.constant 1 : index
    %c0_19 = arith.constant 0 : index
    %c0_20 = arith.constant 0 : index
    %26 = vector.load %arg5[%c0_18, %c1, %c0_19, %c0_20] : memref<1x2x128x128xbf16, #tpu.memory_space<vmem>>, vector<1x1x128x128xbf16>
    %27 = vector.shape_cast %26 : vector<1x1x128x128xbf16> to vector<128x128xbf16>
    %28 = vector.shape_cast %25 : vector<128x128xbf16> to vector<1x1x128x128xbf16>
    tpu.vector_store %arg5[%c0_18, %c1, %c0_19, %c0_20], %28 {strides = array<i32>} : memref<1x2x128x128xbf16, #tpu.memory_space<vmem>>, vector<1x1x128x128xbf16>,
    %29 = vector.extract_strided_slice %8 {offsets = [0, 384], sizes = [128, 128], strides = [1, 1]} : vector<128x768xf32> to vector<128x128xf32>
    %30 = arith.truncf %29 : vector<128x128xf32> to vector<128x128xbf16>
    %c0_21 = arith.constant 0 : index
    %c1_22 = arith.constant 1 : index
    %c0_23 = arith.constant 0 : index
    %c0_24 = arith.constant 0 : index
    %31 = vector.load %arg6[%c0_21, %c1_22, %c0_23, %c0_24] : memref<1x2x128x128xbf16, #tpu.memory_space<vmem>>, vector<1x1x128x128xbf16>
    %32 = vector.shape_cast %31 : vector<1x1x128x128xbf16> to vector<128x128xbf16>
    %33 = vector.shape_cast %30 : vector<128x128xbf16> to vector<1x1x128x128xbf16>
    tpu.vector_store %arg6[%c0_21, %c1_22, %c0_23, %c0_24], %33 {strides = array<i32>} : memref<1x2x128x128xbf16, #tpu.memory_space<vmem>>, vector<1x1x128x128xbf16>,
    %34 = vector.extract_strided_slice %8 {offsets = [0, 640], sizes = [128, 128], strides = [1, 1]} : vector<128x768xf32> to vector<128x128xf32>
    %35 = arith.truncf %34 : vector<128x128xf32> to vector<128x128xbf16>
    %c0_25 = arith.constant 0 : index
    %c1_26 = arith.constant 1 : index
    %c0_27 = arith.constant 0 : index
    %c0_28 = arith.constant 0 : index
    %36 = vector.load %arg7[%c0_25, %c1_26, %c0_27, %c0_28] : memref<1x2x128x128xbf16, #tpu.memory_space<vmem>>, vector<1x1x128x128xbf16>
    %37 = vector.shape_cast %36 : vector<1x1x128x128xbf16> to vector<128x128xbf16>
    %38 = vector.shape_cast %35 : vector<128x128xbf16> to vector<1x1x128x128xbf16>
    tpu.vector_store %arg7[%c0_25, %c1_26, %c0_27, %c0_28], %38 {strides = array<i32>} : memref<1x2x128x128xbf16, #tpu.memory_space<vmem>>, vector<1x1x128x128xbf16>,
    return
  }
  func.func @transform_0(%arg0: i32, %arg1: i32) -> (i32, i32, i32) {
    %c0_i32 = arith.constant 0 : i32
    %c0_i32_0 = arith.constant 0 : i32
    return %arg0, %arg1, %c0_i32 : i32, i32, i32
  }
  func.func @transform_1(%arg0: i32, %arg1: i32) -> (i32, i32) {
    %c0_i32 = arith.constant 0 : i32
    %c0_i32_0 = arith.constant 0 : i32
    %c0_i32_1 = arith.constant 0 : i32
    return %c0_i32, %c0_i32_0 : i32, i32
  }
  func.func @transform_2(%arg0: i32, %arg1: i32) -> (i32, i32) {
    %c0_i32 = arith.constant 0 : i32
    %c0_i32_0 = arith.constant 0 : i32
    %c0_i32_1 = arith.constant 0 : i32
    return %c0_i32, %c0_i32_0 : i32, i32
  }
  func.func @transform_3(%arg0: i32, %arg1: i32) -> (i32, i32, i32, i32) {
    %c0_i32 = arith.constant 0 : i32
    %c0_i32_0 = arith.constant 0 : i32
    %c0_i32_1 = arith.constant 0 : i32
    return %arg0, %c0_i32, %arg1, %c0_i32_0 : i32, i32, i32, i32
  }
  func.func @transform_4(%arg0: i32, %arg1: i32) -> (i32, i32, i32, i32) {
    %c0_i32 = arith.constant 0 : i32
    %c0_i32_0 = arith.constant 0 : i32
    %c0_i32_1 = arith.constant 0 : i32
    return %arg0, %c0_i32, %arg1, %c0_i32_0 : i32, i32, i32, i32
  }
  func.func @transform_5(%arg0: i32, %arg1: i32) -> (i32, i32, i32, i32) {
    %c0_i32 = arith.constant 0 : i32
    %c0_i32_0 = arith.constant 0 : i32
    %c0_i32_1 = arith.constant 0 : i32
    return %arg0, %c0_i32, %arg1, %c0_i32_0 : i32, i32, i32, i32
  }
}

</mosaic_0001>

<llo_original>
// kernel: tpu_custom_call.1
$region0: #{tpu_custom_call.1}
  #allocation0 [shape = 'u32[]', space=smem, size = 0x4, offset = 0x4, fixed_abs, tag = 'smem constant byte address 0x4 - core index']
  #allocation1 [shape = 'u32[144,128]{1,0:T(1,128)}', space=vmem, size = 0x12000, scoped, tag = 'internal scratch']
  %s0 = inlined_call_operand.hbm [shape: f32[8,128], index: 0, kind: input, shape index: {}]
  %s1 = inlined_call_operand.hbm [shape: f32[8,128], index: 1, kind: output, shape index: {}]
  %s2 = sld [smem:[#allocation0]]
  $region41: #{tpu_custom_call.1} parent=0
    _
  %s4 = ssub.s32 1, %s2
  %s5 = scalar_select 0, %s4, %s2
  $region1: #{tpu_custom_call.1} parent=0
    #allocation2 [shape = 'u8[4096]{0}', space=vmem, size = 0x1000, scoped, tag = 'input window, operand 0, single buffered']
    #allocation3 [shape = 's32[2]{0}', space=sflag, size = 0x8, scoped, tag = 'scoped memory for tpu_custom_call.1']
    #allocation4 [shape = 's32[2]{0}', space=sflag, size = 0x8, scoped, tag = 'scoped memory for tpu_custom_call.1']
    #allocation5 [shape = 'u8[4096]{0}', space=vmem, size = 0x1000, scoped, tag = 'output window, operand 0, single buffered']
    %6 = vsyncpa [#allocation3], 0
    %7 = vsyncpa [#allocation4], 0
    loop: start=0, step=1, limit=4
    $region2: #{tpu_custom_call.1} parent=1 // loop_pre_header
      _
    $region3: #{tpu_custom_call.1} parent=1 // loop_header
      %s9 = sphi 0, %s13
      %p10 = scmp.ge.s32.totalorder %s9, 4
      %s17 = sphi 0, %s17
      %s19 = sphi 0, %s17
      %s20 = sphi 0, %s19
      %s34 = sphi 0, %s20
      %s38 = sphi 0, %s38
      %s40 = sphi 0, %s38
      %s41 = sphi 0, %s40
      %s55 = sphi 0, %s41
    $region4: #{tpu_custom_call.1} parent=1 // loop_header_branch
      %12 = sbr.rel (%p10) target = $region8
    $region5: #{tpu_custom_call.1} parent=1 // loop_body
      %s14 = ssub.s32 %s9, 1
      %s15 = ssub.s32 %s9, 2
      %s16 = sadd.s32 %s9, 1
      %s18 = sadd.s32 %s17, 1
      %p21 = scmp.eq.s32.totalorder %s9, 1
      %p22 = scmp.ne.s32.totalorder %s17, %s19
      %p23 = scmp.eq.s32.totalorder %s9, 0
      %p24 = por %p22, %p23
      %p25 = scmp.ne.s32.totalorder %s17, %s19
      %p26 = scmp.eq.s32.totalorder %s14, 1
      %p27 = por %p25, %p26
      %p28 = scmp.ne.s32.totalorder %s19, %s20
      %p29 = scmp.eq.s32.totalorder %s14, 0
      %p30 = por %p28, %p29
      %p31 = scmp.ne.s32.totalorder %s19, %s20
      %p32 = scmp.eq.s32.totalorder %s15, 1
      %p33 = por %p31, %p32
      %p35 = scmp.ne.s32.totalorder %s20, %s34
      %p36 = scmp.eq.s32.totalorder %s15, 0
      %p37 = por %p35, %p36
      %s39 = sadd.s32 %s38, 1
      %p42 = scmp.eq.s32.totalorder %s9, 1
      %p43 = scmp.ne.s32.totalorder %s38, %s40
      %p44 = scmp.eq.s32.totalorder %s9, 0
      %p45 = por %p43, %p44
      %p46 = scmp.ne.s32.totalorder %s38, %s40
      %p47 = scmp.eq.s32.totalorder %s14, 1
      %p48 = por %p46, %p47
      %p49 = scmp.ne.s32.totalorder %s40, %s41
      %p50 = scmp.eq.s32.totalorder %s14, 0
      %p51 = por %p49, %p50
      %p52 = scmp.ne.s32.totalorder %s40, %s41
      %p53 = scmp.eq.s32.totalorder %s15, 1
      %p54 = por %p52, %p53
      %p56 = scmp.ne.s32.totalorder %s41, %s55
      %p57 = scmp.eq.s32.totalorder %s15, 0
      %p58 = por %p56, %p57
      %p59 = scmp.le.s32.totalorder 1, %s9
      %p60 = scmp.lt.s32.totalorder %s9, 3
      %p61 = pnand %p59, %p60
      %p62 = pneg %p61
      // Predicated region
      $region9: #{tpu_custom_call.1} parent=5 // pred_check
        _
      $region10: #{tpu_custom_call.1} parent=5 // pred_check_branch
        %64 = sbr.rel (%p61) target = $region12
      $region11: #{tpu_custom_call.1} parent=5 // pred_region
        %s65 = ssub.s32 %s9, 1
        // Predicated region
        $region13: #{tpu_custom_call.1} parent=11 // pred_check
          %p66 = pneg %p30
        $region14: #{tpu_custom_call.1} parent=11 // pred_check_branch
          %68 = sbr.rel (%p66) target = $region16
        $region15: #{tpu_custom_call.1} parent=11 // pred_region
          %s70 = ssub.s32 128, 128
          %71 = vsyncadd [#allocation3], %s70
          %s73 = sshll.u32 [#allocation2], 4
          %s74 = int_to_ptr.vmem [resolvable:$true] %s73
          %76 = dma.hbm_to_vmem [thread:$0]  %s0, 128, %s74, [#allocation3]
        $region16: #{tpu_custom_call.1} parent=11 // pred_fallthru
          _
      $region12: #{tpu_custom_call.1} parent=5 // pred_fallthru
        _
      %p77 = scmp.lt.s32.totalorder %s9, 2
      // Predicated region
      $region17: #{tpu_custom_call.1} parent=5 // pred_check
        %p78 = pneg %p77
      $region18: #{tpu_custom_call.1} parent=5 // pred_check_branch
        %80 = sbr.rel (%p78) target = $region20
      $region19: #{tpu_custom_call.1} parent=5 // pred_region
        _
      $region20: #{tpu_custom_call.1} parent=5 // pred_fallthru
        _
      %p81 = scmp.le.s32.totalorder 1, %s9
      %p82 = scmp.lt.s32.totalorder %s9, 3
      %p83 = pnand %p81, %p82
      %p84 = pneg %p83
      // Predicated region
      $region21: #{tpu_custom_call.1} parent=5 // pred_check
        _
      $region22: #{tpu_custom_call.1} parent=5 // pred_check_branch
        %86 = sbr.rel (%p83) target = $region24
      $region23: #{tpu_custom_call.1} parent=5 // pred_region
        %s87 = ssub.s32 %s9, 1
        // Predicated region
        $region25: #{tpu_custom_call.1} parent=23 // pred_check
          %p88 = pneg %p30
        $region26: #{tpu_custom_call.1} parent=23 // pred_check_branch
          %90 = sbr.rel (%p88) target = $region28
        $region27: #{tpu_custom_call.1} parent=23 // pred_region
          %91 = dma.done [#allocation3], 128
        $region28: #{tpu_custom_call.1} parent=23 // pred_fallthru
          _
        %p92 = pneg %p30
        %p93 = pneg %p27
        %p94 = pneg %p51
        %p95 = pneg %p48
        %v96 = vld [vmem:[#allocation2] sm:$0xff]
        %v97 = vadd.f32 %v96, 1.0
        %98 = vst [vmem:[#allocation5] sm:$0xff] %v97
        // Predicated region
        $region29: #{tpu_custom_call.1} parent=23 // pred_check
          %p99 = pneg %p48
        $region30: #{tpu_custom_call.1} parent=23 // pred_check_branch
          %101 = sbr.rel (%p99) target = $region32
        $region31: #{tpu_custom_call.1} parent=23 // pred_region
          %s103 = ssub.s32 128, 128
          %104 = vsyncadd [#allocation4], %s103
          %s106 = sshll.u32 [#allocation5], 4
          %s107 = int_to_ptr.vmem [resolvable:$true] %s106
          %109 = dma.vmem_to_hbm [thread:$0]  %s107, 128, %s1, [#allocation4]
        $region32: #{tpu_custom_call.1} parent=23 // pred_fallthru
          _
        // Predicated region
        $region33: #{tpu_custom_call.1} parent=23 // pred_check
          %p110 = pneg %p48
        $region34: #{tpu_custom_call.1} parent=23 // pred_check_branch
          %112 = sbr.rel (%p110) target = $region36
        $region35: #{tpu_custom_call.1} parent=23 // pred_region
          %113 = dma.done [#allocation4], 128
        $region36: #{tpu_custom_call.1} parent=23 // pred_fallthru
          _
      $region24: #{tpu_custom_call.1} parent=5 // pred_fallthru
        _
      %p114 = scmp.le.s32.totalorder 2, %s9
      // Predicated region
      $region37: #{tpu_custom_call.1} parent=5 // pred_check
        %p115 = pneg %p114
      $region38: #{tpu_custom_call.1} parent=5 // pred_check_branch
        %117 = sbr.rel (%p115) target = $region40
      $region39: #{tpu_custom_call.1} parent=5 // pred_region
        %s118 = ssub.s32 %s9, 2
      $region40: #{tpu_custom_call.1} parent=5 // pred_fallthru
        _
    $region6: #{tpu_custom_call.1} parent=1 // loop_footer
      %s13 = sadd.s32 1, %s9
    $region7: #{tpu_custom_call.1} parent=1 // loop_footer_branch
      %8 = sbr.rel target = $region3
    $region8: #{tpu_custom_call.1} parent=1 // loop_exit
      _
    %119 = vsyncpa [#allocation3], 1
    %s120 = scalar_lea.sflag [#allocation3], 1
    %121 = vsyncpa %s120, 1
    %122 = vsyncpa [#allocation4], 1
    %s123 = scalar_lea.sflag [#allocation4], 1
    %124 = vsyncpa %s123, 1

// kernel: tpu_custom_call.1
$region0: #{tpu_custom_call.1}
  #allocation0 [shape = 'u32[]', space=smem, size = 0x4, offset = 0x4, fixed_abs, tag = 'smem constant byte address 0x4 - core index']
  #allocation1 [shape = 'u32[144,128]{1,0:T(1,128)}', space=vmem, size = 0x12000, scoped, tag = 'internal scratch']
  #allocation12 [shape = 's32[]', space=sflag, size = 0x4, offset = 0, fixed_abs, tag = 'sflag constant byte address 0x0 - dummy sync flag']
  #allocation14 [shape = 's32[]', space=sflag, size = 0x4, offset = 0, fixed_abs, tag = 'sflag constant byte address 0x0 - dummy sync flag']
  #allocation16 [shape = 's32[]', space=sflag, size = 0x4, offset = 0, fixed_abs, tag = 'sflag constant byte address 0x0 - dummy sync flag']
  %s0 = inlined_call_operand.hbm [shape: bf16[2,512,256], index: 0, kind: input, shape index: {}]
  %s1 = inlined_call_operand.hbm [shape: bf16[256,768], index: 1, kind: input, shape index: {}]
  %s2 = inlined_call_operand.hbm [shape: f32[1,768], index: 2, kind: input, shape index: {}]
  %s3 = inlined_call_operand.hbm [shape: bf16[2,2,512,128], index: 3, kind: output, shape index: {0}]
  %s4 = inlined_call_operand.hbm [shape: bf16[2,2,512,128], index: 4, kind: output, shape index: {1}]
  %s5 = inlined_call_operand.hbm [shape: bf16[2,2,512,128], index: 5, kind: output, shape index: {2}]
  %6 = xla_tuple %s3, %s4, %s5
  %s7 = sld [smem:[#allocation0]]
  $region73: #{tpu_custom_call.1} parent=0
    _
  %s9 = ssub.s32 1, %s7
  %s10 = scalar_select 0, %s9, %s7
  $region1: #{tpu_custom_call.1} parent=0
    #allocation2 [shape = 'u8[131072]{0}', space=vmem, size = 0x20000, scoped, tag = 'input window, operand 0']
    #allocation3 [shape = 's32[2]{0}', space=sflag, size = 0x8, scoped, tag = 'scoped memory for tpu_custom_call.1']
    #allocation4 [shape = 's32[2]{0}', space=sflag, size = 0x8, scoped, tag = 'scoped memory for tpu_custom_call.1']
    #allocation5 [shape = 'u8[393216]{0}', space=vmem, size = 0x60000, scoped, tag = 'input window, operand 1, single buffered']
    #allocation6 [shape = 's32[1]{0}', space=sflag, size = 0x4, scoped, tag = 'scoped memory for tpu_custom_call.1']
    #allocation7 [shape = 'u8[3072]{0}', space=vmem, size = 0xc00, scoped, tag = 'input window, operand 2, single buffered']
    #allocation8 [shape = 'u8[131072]{0}', space=vmem, size = 0x20000, scoped, tag = 'output window, operand 0']
    #allocation9 [shape = 'u8[131072]{0}', space=vmem, size = 0x20000, scoped, tag = 'output window, operand 1']
    #allocation10 [shape = 's32[2]{0}', space=sflag, size = 0x8, scoped, tag = 'scoped memory for tpu_custom_call.1']
    #allocation11 [shape = 'u8[131072]{0}', space=vmem, size = 0x20000, scoped, tag = 'output window, operand 2']
    %11 = vsyncpa [#allocation3], 0
    %s12 = scalar_lea.sflag [#allocation3], 1
    %13 = vsyncpa %s12, 0
    %14 = vsyncpa [#allocation6], 0
    %15 = vsyncpa [#allocation4], 0
    %s16 = scalar_lea.sflag [#allocation4], 1
    %17 = vsyncpa %s16, 0
    %18 = vsyncpa [#allocation10], 0
    %s19 = scalar_lea.sflag [#allocation10], 1
    %20 = vsyncpa %s19, 0
    loop: start=0, step=1, limit=10
    $region2: #{tpu_custom_call.1} parent=1 // loop_pre_header
      _
    $region3: #{tpu_custom_call.1} parent=1 // loop_header
      %s22 = sphi 0, %s26
      %p23 = scmp.ge.s32.totalorder %s22, 10
      %s29 = sphi 0, %s41
      %s30 = sphi 0, %s37
      %s31 = sphi 0, %s29
      %s32 = sphi 0, %s30
      %s33 = sphi 0, %s31
      %s34 = sphi 0, %s32
      %s46 = sphi 0, %s48
      %s49 = sphi 0, %s46
      %s50 = sphi 0, %s49
      %s66 = sphi 0, %s50
      %s70 = sphi 0, %s70
      %s72 = sphi 0, %s70
      %s73 = sphi 0, %s72
      %s87 = sphi 0, %s73
      %s91 = sphi 0, %s91
      %s93 = sphi 0, %s91
      %s94 = sphi 0, %s93
      %s108 = sphi 0, %s94
      %s116 = sphi 0, %s118
      %s119 = sphi 0, %s116
      %s120 = sphi 0, %s119
      %s136 = sphi 0, %s120
      %s144 = sphi 0, %s146
      %s147 = sphi 0, %s144
      %s148 = sphi 0, %s147
      %s164 = sphi 0, %s148
      %s172 = sphi 0, %s174
      %s175 = sphi 0, %s172
      %s176 = sphi 0, %s175
      %s192 = sphi 0, %s176
    $region4: #{tpu_custom_call.1} parent=1 // loop_header_branch
      %25 = sbr.rel (%p23) target = $region8
    $region5: #{tpu_custom_call.1} parent=1 // loop_body
      %s27 = ssub.s32 %s22, 1
      %s28 = ssub.s32 %s22, 2
      %s35 = sadd.s32 1, %s30
      %p36 = scmp.ge.s32.totalorder %s35, 4
      %s37 = scalar_select %p36, 0, %s35
      %s38 = sadd.s32 1, %s29
      %s39 = scalar_select %p36, %s38, %s29
      %p40 = scmp.ge.s32.totalorder %s39, 2
      %s41 = scalar_select %p40, 0, %s39
      %s42 = ssub.s32 %s29, %s41
      %s43 = ssub.s32 %s30, %s37
      %s44 = sor.u32 %s42, %s43
      %p45 = scmp.eq.s32.totalorder %s44, 0
      %s47 = sadd.s32 %s46, 1
      %s48 = scalar_select %p45, %s46, %s47
      %p51 = pneg %p45
      %p52 = scmp.eq.s32.totalorder %s22, 7
      %p53 = por %p51, %p52
      %p54 = scmp.ne.s32.totalorder %s46, %s49
      %p55 = scmp.eq.s32.totalorder %s22, 0
      %p56 = por %p54, %p55
      %p57 = scmp.ne.s32.totalorder %s46, %s49
      %p58 = scmp.eq.s32.totalorder %s27, 7
      %p59 = por %p57, %p58
      %p60 = scmp.ne.s32.totalorder %s49, %s50
      %p61 = scmp.eq.s32.totalorder %s27, 0
      %p62 = por %p60, %p61
      %p63 = scmp.ne.s32.totalorder %s49, %s50
      %p64 = scmp.eq.s32.totalorder %s28, 7
      %p65 = por %p63, %p64
      %p67 = scmp.ne.s32.totalorder %s50, %s66
      %p68 = scmp.eq.s32.totalorder %s28, 0
      %p69 = por %p67, %p68
      %s71 = sadd.s32 %s70, 1
      %p74 = scmp.eq.s32.totalorder %s22, 7
      %p75 = scmp.ne.s32.totalorder %s70, %s72
      %p76 = scmp.eq.s32.totalorder %s22, 0
      %p77 = por %p75, %p76
      %p78 = scmp.ne.s32.totalorder %s70, %s72
      %p79 = scmp.eq.s32.totalorder %s27, 7
      %p80 = por %p78, %p79
      %p81 = scmp.ne.s32.totalorder %s72, %s73
      %p82 = scmp.eq.s32.totalorder %s27, 0
      %p83 = por %p81, %p82
      %p84 = scmp.ne.s32.totalorder %s72, %s73
      %p85 = scmp.eq.s32.totalorder %s28, 7
      %p86 = por %p84, %p85
      %p88 = scmp.ne.s32.totalorder %s73, %s87
      %p89 = scmp.eq.s32.totalorder %s28, 0
      %p90 = por %p88, %p89
      %s92 = sadd.s32 %s91, 1
      %p95 = scmp.eq.s32.totalorder %s22, 7
      %p96 = scmp.ne.s32.totalorder %s91, %s93
      %p97 = scmp.eq.s32.totalorder %s22, 0
      %p98 = por %p96, %p97
      %p99 = scmp.ne.s32.totalorder %s91, %s93
      %p100 = scmp.eq.s32.totalorder %s27, 7
      %p101 = por %p99, %p100
      %p102 = scmp.ne.s32.totalorder %s93, %s94
      %p103 = scmp.eq.s32.totalorder %s27, 0
      %p104 = por %p102, %p103
      %p105 = scmp.ne.s32.totalorder %s93, %s94
      %p106 = scmp.eq.s32.totalorder %s28, 7
      %p107 = por %p105, %p106
      %p109 = scmp.ne.s32.totalorder %s94, %s108
      %p110 = scmp.eq.s32.totalorder %s28, 0
      %p111 = por %p109, %p110
      %s112 = ssub.s32 %s29, %s41
      %s113 = ssub.s32 %s30, %s37
      %s114 = sor.u32 %s112, %s113
      %p115 = scmp.eq.s32.totalorder %s114, 0
      %s117 = sadd.s32 %s116, 1
      %s118 = scalar_select %p115, %s116, %s117
      %p121 = pneg %p115
      %p122 = scmp.eq.s32.totalorder %s22, 7
      %p123 = por %p121, %p122
      %p124 = scmp.ne.s32.totalorder %s116, %s119
      %p125 = scmp.eq.s32.totalorder %s22, 0
      %p126 = por %p124, %p125
      %p127 = scmp.ne.s32.totalorder %s116, %s119
      %p128 = scmp.eq.s32.totalorder %s27, 7
      %p129 = por %p127, %p128
      %p130 = scmp.ne.s32.totalorder %s119, %s120
      %p131 = scmp.eq.s32.totalorder %s27, 0
      %p132 = por %p130, %p131
      %p133 = scmp.ne.s32.totalorder %s119, %s120
      %p134 = scmp.eq.s32.totalorder %s28, 7
      %p135 = por %p133, %p134
      %p137 = scmp.ne.s32.totalorder %s120, %s136
      %p138 = scmp.eq.s32.totalorder %s28, 0
      %p139 = por %p137, %p138
      %s140 = ssub.s32 %s29, %s41
      %s141 = ssub.s32 %s30, %s37
      %s142 = sor.u32 %s140, %s141
      %p143 = scmp.eq.s32.totalorder %s142, 0
      %s145 = sadd.s32 %s144, 1
      %s146 = scalar_select %p143, %s144, %s145
      %p149 = pneg %p143
      %p150 = scmp.eq.s32.totalorder %s22, 7
      %p151 = por %p149, %p150
      %p152 = scmp.ne.s32.totalorder %s144, %s147
      %p153 = scmp.eq.s32.totalorder %s22, 0
      %p154 = por %p152, %p153
      %p155 = scmp.ne.s32.totalorder %s144, %s147
      %p156 = scmp.eq.s32.totalorder %s27, 7
      %p157 = por %p155, %p156
      %p158 = scmp.ne.s32.totalorder %s147, %s148
      %p159 = scmp.eq.s32.totalorder %s27, 0
      %p160 = por %p158, %p159
      %p161 = scmp.ne.s32.totalorder %s147, %s148
      %p162 = scmp.eq.s32.totalorder %s28, 7
      %p163 = por %p161, %p162
      %p165 = scmp.ne.s32.totalorder %s148, %s164
      %p166 = scmp.eq.s32.totalorder %s28, 0
      %p167 = por %p165, %p166
      %s168 = ssub.s32 %s29, %s41
      %s169 = ssub.s32 %s30, %s37
      %s170 = sor.u32 %s168, %s169
      %p171 = scmp.eq.s32.totalorder %s170, 0
      %s173 = sadd.s32 %s172, 1
      %s174 = scalar_select %p171, %s172, %s173
      %p177 = pneg %p171
      %p178 = scmp.eq.s32.totalorder %s22, 7
      %p179 = por %p177, %p178
      %p180 = scmp.ne.s32.totalorder %s172, %s175
      %p181 = scmp.eq.s32.totalorder %s22, 0
      %p182 = por %p180, %p181
      %p183 = scmp.ne.s32.totalorder %s172, %s175
      %p184 = scmp.eq.s32.totalorder %s27, 7
      %p185 = por %p183, %p184
      %p186 = scmp.ne.s32.totalorder %s175, %s176
      %p187 = scmp.eq.s32.totalorder %s27, 0
      %p188 = por %p186, %p187
      %p189 = scmp.ne.s32.totalorder %s175, %s176
      %p190 = scmp.eq.s32.totalorder %s28, 7
      %p191 = por %p189, %p190
      %p193 = scmp.ne.s32.totalorder %s176, %s192
      %p194 = scmp.eq.s32.totalorder %s28, 0
      %p195 = por %p193, %p194
      %p196 = scmp.le.s32.totalorder 1, %s22
      %p197 = scmp.lt.s32.totalorder %s22, 9
      %p198 = pnand %p196, %p197
      %p199 = pneg %p198
      // Predicated region
      $region9: #{tpu_custom_call.1} parent=5 // pred_check
        _
      $region10: #{tpu_custom_call.1} parent=5 // pred_check_branch
        %201 = sbr.rel (%p198) target = $region12
      $region11: #{tpu_custom_call.1} parent=5 // pred_region
        %s202 = ssub.s32 %s22, 1
        // Predicated region
        $region13: #{tpu_custom_call.1} parent=11 // pred_check
          %p203 = pneg %p83
        $region14: #{tpu_custom_call.1} parent=11 // pred_check_branch
          %205 = sbr.rel (%p203) target = $region16
        $region15: #{tpu_custom_call.1} parent=11 // pred_region
          %s207 = ssub.s32 12288, 12288
          %208 = vsyncadd [#allocation6], %s207
          %s209 = sshll.u32 [#allocation5], 4
          %s210 = int_to_ptr.vmem [resolvable:$true] %s209
          %215 = dma.hbm_to_vmem [thread:$0]  %s1, 12288, %s210, [#allocation6], 384, 384, 24
        $region16: #{tpu_custom_call.1} parent=11 // pred_fallthru
          _
        // Predicated region
        $region17: #{tpu_custom_call.1} parent=11 // pred_check
          %p216 = pneg %p104
        $region18: #{tpu_custom_call.1} parent=11 // pred_check_branch
          %218 = sbr.rel (%p216) target = $region20
        $region19: #{tpu_custom_call.1} parent=11 // pred_region
          %s220 = ssub.s32 96, 96
          %221 = vsyncadd [#allocation6], %s220
          %s223 = sshll.u32 [#allocation7], 4
          %s224 = int_to_ptr.vmem [resolvable:$true] %s223
          %226 = dma.hbm_to_vmem [thread:$0]  %s2, 96, %s224, [#allocation6]
        $region20: #{tpu_custom_call.1} parent=11 // pred_fallthru
          _
      $region12: #{tpu_custom_call.1} parent=5 // pred_fallthru
        _
      %p227 = scmp.lt.s32.totalorder %s22, 8
      // Predicated region
      $region21: #{tpu_custom_call.1} parent=5 // pred_check
        %p228 = pneg %p227
      $region22: #{tpu_custom_call.1} parent=5 // pred_check_branch
        %230 = sbr.rel (%p228) target = $region24
      $region23: #{tpu_custom_call.1} parent=5 // pred_region
        // Predicated region
        $region25: #{tpu_custom_call.1} parent=23 // pred_check
          %p231 = pneg %p56
        $region26: #{tpu_custom_call.1} parent=23 // pred_check_branch
          %233 = sbr.rel (%p231) target = $region28
        $region27: #{tpu_custom_call.1} parent=23 // pred_region
          %s234 = sand.u32 %s46, 1
          %s235 = scalar_lea.sflag [#allocation3], %s234
          %s236 = sand.u32 %s46, 1
          %s237 = smul.addr %s236, 128
          %s238 = scalar_lea.vmem [#allocation2], %s237
          %s239 = smul.u32 16, %s30
          %s241 = ssub.s32 2048, 2048
          %242 = vsyncadd %s235, %s241
          %s243 = smul.addr %s239, 2
          %s244 = smul.addr %s29, 128
          %s245 = sadd.s32 %s243, %s244
          %s246 = smul.addr %s245, 64
          %s247 = scalar_lea.hbm %s0, %s246
          %s248 = sshll.u32 %s238, 4
          %s249 = int_to_ptr.vmem [resolvable:$true] %s248
          %254 = dma.hbm_to_vmem [thread:$0]  %s247, 2048, %s249, %s235, 128, 128, 8
        $region28: #{tpu_custom_call.1} parent=23 // pred_fallthru
          _
      $region24: #{tpu_custom_call.1} parent=5 // pred_fallthru
        _
      %p255 = scmp.le.s32.totalorder 1, %s22
      %p256 = scmp.lt.s32.totalorder %s22, 9
      %p257 = pnand %p255, %p256
      %p258 = pneg %p257
      // Predicated region
      $region29: #{tpu_custom_call.1} parent=5 // pred_check
        _
      $region30: #{tpu_custom_call.1} parent=5 // pred_check_branch
        %260 = sbr.rel (%p257) target = $region32
      $region31: #{tpu_custom_call.1} parent=5 // pred_region
        %s261 = ssub.s32 %s22, 1
        %s262 = sand.u32 %s49, 1
        %s263 = scalar_lea.sflag [#allocation3], %s262
        %s264 = sand.u32 %s49, 1
        %s265 = smul.addr %s264, 128
        %s266 = scalar_lea.vmem [#allocation2], %s265
        // Predicated region
        $region33: #{tpu_custom_call.1} parent=31 // pred_check
          %p267 = pneg %p62
        $region34: #{tpu_custom_call.1} parent=31 // pred_check_branch
          %269 = sbr.rel (%p267) target = $region36
        $region35: #{tpu_custom_call.1} parent=31 // pred_region
          %270 = dma.done %s263, 2048
        $region36: #{tpu_custom_call.1} parent=31 // pred_fallthru
          _
        // Predicated region
        $region37: #{tpu_custom_call.1} parent=31 // pred_check
          %p271 = pneg %p83
        $region38: #{tpu_custom_call.1} parent=31 // pred_check_branch
          %273 = sbr.rel (%p271) target = $region40
        $region39: #{tpu_custom_call.1} parent=31 // pred_region
          %274 = dma.done [#allocation6], 12288
        $region40: #{tpu_custom_call.1} parent=31 // pred_fallthru
          _
        // Predicated region
        $region41: #{tpu_custom_call.1} parent=31 // pred_check
          %p275 = pneg %p104
        $region42: #{tpu_custom_call.1} parent=31 // pred_check_branch
          %277 = sbr.rel (%p275) target = $region44
        $region43: #{tpu_custom_call.1} parent=31 // pred_region
          %278 = dma.done [#allocation6], 96
        $region44: #{tpu_custom_call.1} parent=31 // pred_fallthru
          _
        %s279 = sand.u32 %s49, 1
        %s280 = scalar_lea.sflag [#allocation3], %s279
        %s281 = sand.u32 %s49, 1
        %s282 = smul.addr %s281, 128
        %s283 = scalar_lea.vmem [#allocation2], %s282
        %p284 = pneg %p62
        %p285 = pneg %p59
        %p286 = pneg %p83
        %p287 = pneg %p80
        %p288 = pneg %p104
        %p289 = pneg %p101
        %p290 = pneg %p132
        %p291 = pneg %p129
        %s292 = sand.u32 %s119, 1
        %s293 = scalar_lea.sflag [#allocation4], %s292
        %s294 = sand.u32 %s119, 1
        %s295 = smul.addr %s294, 128
        %s296 = scalar_lea.vmem [#allocation8], %s295
        %p297 = pneg %p160
        %p298 = pneg %p157
        %s299 = sand.u32 %s27, 1
        %s300 = scalar_lea.sflag [#allocation10], %s299
        %s301 = sand.u32 %s147, 1
        %s302 = smul.addr %s301, 128
        %s303 = scalar_lea.vmem [#allocation9], %s302
        %p304 = pneg %p188
        %p305 = pneg %p185
        %s306 = sand.u32 %s27, 1
        %s307 = scalar_lea.sflag [#allocation10], %s306
        %s308 = sand.u32 %s175, 1
        %s309 = smul.addr %s308, 128
        %s310 = scalar_lea.vmem [#allocation11], %s309
        %s311 = smul.u32 16, %s32
        %s312 = smul.u32 16, %s32
        %s313 = smul.u32 16, %s32
        %s314 = smul.u32 16, %s32
        %v315 = vld [vmem:[%s266] sm:$0xff]
        %v316 = vld [vmem:[%s266 + $0x8] sm:$0xff]
        %v317 = vld [vmem:[%s266 + $0x10] sm:$0xff]
        %v318 = vld [vmem:[%s266 + $0x18] sm:$0xff]
        %v319 = vld [vmem:[%s266 + $0x20] sm:$0xff]
        %v320 = vld [vmem:[%s266 + $0x28] sm:$0xff]
        %v321 = vld [vmem:[%s266 + $0x30] sm:$0xff]
        %v322 = vld [vmem:[%s266 + $0x38] sm:$0xff]
        %v323 = vld [vmem:[%s266 + $0x40] sm:$0xff]
        %v324 = vld [vmem:[%s266 + $0x48] sm:$0xff]
        %v325 = vld [vmem:[%s266 + $0x50] sm:$0xff]
        %v326 = vld [vmem:[%s266 + $0x58] sm:$0xff]
        %v327 = vld [vmem:[%s266 + $0x60] sm:$0xff]
        %v328 = vld [vmem:[%s266 + $0x68] sm:$0xff]
        %v329 = vld [vmem:[%s266 + $0x70] sm:$0xff]
        %v330 = vld [vmem:[%s266 + $0x78] sm:$0xff]
        %v331 = vld [vmem:[#allocation5] sm:$0xff]
        %v332 = vld [vmem:[#allocation5 + $0x8] sm:$0xff]
        %v333 = vld [vmem:[#allocation5 + $0x10] sm:$0xff]
        %v334 = vld [vmem:[#allocation5 + $0x18] sm:$0xff]
        %v335 = vld [vmem:[#allocation5 + $0x20] sm:$0xff]
        %v336 = vld [vmem:[#allocation5 + $0x28] sm:$0xff]
        %v337 = vld [vmem:[#allocation5 + $0x30] sm:$0xff]
        %v338 = vld [vmem:[#allocation5 + $0x38] sm:$0xff]
        %v339 = vld [vmem:[#allocation5 + $0x40] sm:$0xff]
        %v340 = vld [vmem:[#allocation5 + $0x48] sm:$0xff]
        %v341 = vld [vmem:[#allocation5 + $0x50] sm:$0xff]
        %v342 = vld [vmem:[#allocation5 + $0x58] sm:$0xff]
        %v343 = vld [vmem:[#allocation5 + $0x60] sm:$0xff]
        %v344 = vld [vmem:[#allocation5 + $0x68] sm:$0xff]
        %v345 = vld [vmem:[#allocation5 + $0x70] sm:$0xff]
        %v346 = vld [vmem:[#allocation5 + $0x78] sm:$0xff]
        %v347 = vld [vmem:[#allocation5 + $0x80] sm:$0xff]
        %v348 = vld [vmem:[#allocation5 + $0x88] sm:$0xff]
        %v349 = vld [vmem:[#allocation5 + $0x90] sm:$0xff]
        %v350 = vld [vmem:[#allocation5 + $0x98] sm:$0xff]
        %v351 = vld [vmem:[#allocation5 + $0xa0] sm:$0xff]
        %v352 = vld [vmem:[#allocation5 + $0xa8] sm:$0xff]
        %v353 = vld [vmem:[#allocation5 + $0xb0] sm:$0xff]
        %v354 = vld [vmem:[#allocation5 + $0xb8] sm:$0xff]
        %v355 = vld [vmem:[#allocation5 + $0xc0] sm:$0xff]
        %v356 = vld [vmem:[#allocation5 + $0xc8] sm:$0xff]
        %v357 = vld [vmem:[#allocation5 + $0xd0] sm:$0xff]
        %v358 = vld [vmem:[#allocation5 + $0xd8] sm:$0xff]
        %v359 = vld [vmem:[#allocation5 + $0xe0] sm:$0xff]
        %v360 = vld [vmem:[#allocation5 + $0xe8] sm:$0xff]
        %v361 = vld [vmem:[#allocation5 + $0xf0] sm:$0xff]
        %v362 = vld [vmem:[#allocation5 + $0xf8] sm:$0xff]
        %v363 = vld [vmem:[#allocation5 + $0x100] sm:$0xff]
        %v364 = vld [vmem:[#allocation5 + $0x108] sm:$0xff]
        %v365 = vld [vmem:[#allocation5 + $0x110] sm:$0xff]
        %v366 = vld [vmem:[#allocation5 + $0x118] sm:$0xff]
        %v367 = vld [vmem:[#allocation5 + $0x120] sm:$0xff]
        %v368 = vld [vmem:[#allocation5 + $0x128] sm:$0xff]
        %v369 = vld [vmem:[#allocation5 + $0x130] sm:$0xff]
        %v370 = vld [vmem:[#allocation5 + $0x138] sm:$0xff]
        %v371 = vld [vmem:[#allocation5 + $0x140] sm:$0xff]
        %v372 = vld [vmem:[#allocation5 + $0x148] sm:$0xff]
        %v373 = vld [vmem:[#allocation5 + $0x150] sm:$0xff]
        %v374 = vld [vmem:[#allocation5 + $0x158] sm:$0xff]
        %v375 = vld [vmem:[#allocation5 + $0x160] sm:$0xff]
        %v376 = vld [vmem:[#allocation5 + $0x168] sm:$0xff]
        %v377 = vld [vmem:[#allocation5 + $0x170] sm:$0xff]
        %v378 = vld [vmem:[#allocation5 + $0x178] sm:$0xff]
        %v379 = vld [vmem:[#allocation5 + $0x180] sm:$0xff]
        %v380 = vld [vmem:[#allocation5 + $0x188] sm:$0xff]
        %v381 = vld [vmem:[#allocation5 + $0x190] sm:$0xff]
        %v382 = vld [vmem:[#allocation5 + $0x198] sm:$0xff]
        %v383 = vld [vmem:[#allocation5 + $0x1a0] sm:$0xff]
        %v384 = vld [vmem:[#allocation5 + $0x1a8] sm:$0xff]
        %v385 = vld [vmem:[#allocation5 + $0x1b0] sm:$0xff]
        %v386 = vld [vmem:[#allocation5 + $0x1b8] sm:$0xff]
        %v387 = vld [vmem:[#allocation5 + $0x1c0] sm:$0xff]
        %v388 = vld [vmem:[#allocation5 + $0x1c8] sm:$0xff]
        %v389 = vld [vmem:[#allocation5 + $0x1d0] sm:$0xff]
        %v390 = vld [vmem:[#allocation5 + $0x1d8] sm:$0xff]
        %v391 = vld [vmem:[#allocation5 + $0x1e0] sm:$0xff]
        %v392 = vld [vmem:[#allocation5 + $0x1e8] sm:$0xff]
        %v393 = vld [vmem:[#allocation5 + $0x1f0] sm:$0xff]
        %v394 = vld [vmem:[#allocation5 + $0x1f8] sm:$0xff]
        %v395 = vld [vmem:[#allocation5 + $0x200] sm:$0xff]
        %v396 = vld [vmem:[#allocation5 + $0x208] sm:$0xff]
        %v397 = vld [vmem:[#allocation5 + $0x210] sm:$0xff]
        %v398 = vld [vmem:[#allocation5 + $0x218] sm:$0xff]
        %v399 = vld [vmem:[#allocation5 + $0x220] sm:$0xff]
        %v400 = vld [vmem:[#allocation5 + $0x228] sm:$0xff]
        %v401 = vld [vmem:[#allocation5 + $0x230] sm:$0xff]
        %v402 = vld [vmem:[#allocation5 + $0x238] sm:$0xff]
        %v403 = vld [vmem:[#allocation5 + $0x240] sm:$0xff]
        %v404 = vld [vmem:[#allocation5 + $0x248] sm:$0xff]
        %v405 = vld [vmem:[#allocation5 + $0x250] sm:$0xff]
        %v406 = vld [vmem:[#allocation5 + $0x258] sm:$0xff]
        %v407 = vld [vmem:[#allocation5 + $0x260] sm:$0xff]
        %v408 = vld [vmem:[#allocation5 + $0x268] sm:$0xff]
        %v409 = vld [vmem:[#allocation5 + $0x270] sm:$0xff]
        %v410 = vld [vmem:[#allocation5 + $0x278] sm:$0xff]
        %v411 = vld [vmem:[#allocation5 + $0x280] sm:$0xff]
        %v412 = vld [vmem:[#allocation5 + $0x288] sm:$0xff]
        %v413 = vld [vmem:[#allocation5 + $0x290] sm:$0xff]
        %v414 = vld [vmem:[#allocation5 + $0x298] sm:$0xff]
        %v415 = vld [vmem:[#allocation5 + $0x2a0] sm:$0xff]
        %v416 = vld [vmem:[#allocation5 + $0x2a8] sm:$0xff]
        %v417 = vld [vmem:[#allocation5 + $0x2b0] sm:$0xff]
        %v418 = vld [vmem:[#allocation5 + $0x2b8] sm:$0xff]
        %v419 = vld [vmem:[#allocation5 + $0x2c0] sm:$0xff]
        %v420 = vld [vmem:[#allocation5 + $0x2c8] sm:$0xff]
        %v421 = vld [vmem:[#allocation5 + $0x2d0] sm:$0xff]
        %v422 = vld [vmem:[#allocation5 + $0x2d8] sm:$0xff]
        %v423 = vld [vmem:[#allocation5 + $0x2e0] sm:$0xff]
        %v424 = vld [vmem:[#allocation5 + $0x2e8] sm:$0xff]
        %v425 = vld [vmem:[#allocation5 + $0x2f0] sm:$0xff]
        %v426 = vld [vmem:[#allocation5 + $0x2f8] sm:$0xff]
        %v427 = vld [vmem:[#allocation7] sm:$0x3f]
        %v429 = vlaneseq
        %v430 = vshrl.u32 %v429, 7
        %v431 = vsub.s32 0, %v430
        %v432 = vrot.slane %v427, %v431
        %v433 = vlaneseq
        %v434 = vshrl.u32 %v433, 7
        %v435 = vsub.s32 1, %v434
        %v436 = vrot.slane %v427, %v435
        %v437 = vlaneseq
        %v438 = vshrl.u32 %v437, 7
        %v439 = vsub.s32 2, %v438
        %v440 = vrot.slane %v427, %v439
        %v441 = vlaneseq
        %v442 = vshrl.u32 %v441, 7
        %v443 = vsub.s32 3, %v442
        %v444 = vrot.slane %v427, %v443
        %v445 = vlaneseq
        %v446 = vshrl.u32 %v445, 7
        %v447 = vsub.s32 4, %v446
        %v448 = vrot.slane %v427, %v447
        %v449 = vlaneseq
        %v450 = vshrl.u32 %v449, 7
        %v451 = vsub.s32 5, %v450
        %v452 = vrot.slane %v427, %v451
        %v475 = vunpack.c.l.b16 %v315
        %v476 = vunpack.c.h.b16 %v315
        %v477 = vunpack.c.l.b16 %v316
        %v478 = vunpack.c.h.b16 %v316
        %v479 = vunpack.c.l.b16 %v317
        %v480 = vunpack.c.h.b16 %v317
        %v481 = vunpack.c.l.b16 %v318
        %v482 = vunpack.c.h.b16 %v318
        %v483 = vunpack.c.l.b16 %v319
        %v484 = vunpack.c.h.b16 %v319
        %v485 = vunpack.c.l.b16 %v320
        %v486 = vunpack.c.h.b16 %v320
        %v487 = vunpack.c.l.b16 %v321
        %v488 = vunpack.c.h.b16 %v321
        %v489 = vunpack.c.l.b16 %v322
        %v490 = vunpack.c.h.b16 %v322
        %v491 = vunpack.c.l.b16 %v323
        %v492 = vunpack.c.h.b16 %v323
        %v493 = vunpack.c.l.b16 %v324
        %v494 = vunpack.c.h.b16 %v324
        %v495 = vunpack.c.l.b16 %v325
        %v496 = vunpack.c.h.b16 %v325
        %v497 = vunpack.c.l.b16 %v326
        %v498 = vunpack.c.h.b16 %v326
        %v499 = vunpack.c.l.b16 %v327
        %v500 = vunpack.c.h.b16 %v327
        %v501 = vunpack.c.l.b16 %v328
        %v502 = vunpack.c.h.b16 %v328
        %v503 = vunpack.c.l.b16 %v329
        %v504 = vunpack.c.h.b16 %v329
        %v505 = vunpack.c.l.b16 %v330
        %v506 = vunpack.c.h.b16 %v330
        %v507 = vpack.c.b16 %v477, %v475
        %v508 = vpack.c.b16 %v478, %v476
        %v509 = vpack.c.b16 %v481, %v479
        %v510 = vpack.c.b16 %v482, %v480
        %v511 = vpack.c.b16 %v485, %v483
        %v512 = vpack.c.b16 %v486, %v484
        %v513 = vpack.c.b16 %v489, %v487
        %v514 = vpack.c.b16 %v490, %v488
        %v515 = vpack.c.b16 %v493, %v491
        %v516 = vpack.c.b16 %v494, %v492
        %v517 = vpack.c.b16 %v497, %v495
        %v518 = vpack.c.b16 %v498, %v496
        %v519 = vpack.c.b16 %v501, %v499
        %v520 = vpack.c.b16 %v502, %v500
        %v521 = vpack.c.b16 %v505, %v503
        %v522 = vpack.c.b16 %v506, %v504
        %v635 = vunpack.c.l.b16 %v331
        %v636 = vunpack.c.h.b16 %v331
        %v637 = vunpack.c.l.b16 %v332
        %v638 = vunpack.c.h.b16 %v332
        %v639 = vunpack.c.l.b16 %v333
        %v640 = vunpack.c.h.b16 %v333
        %v641 = vunpack.c.l.b16 %v334
        %v642 = vunpack.c.h.b16 %v334
        %v643 = vunpack.c.l.b16 %v335
        %v644 = vunpack.c.h.b16 %v335
        %v645 = vunpack.c.l.b16 %v336
        %v646 = vunpack.c.h.b16 %v336
        %v647 = vunpack.c.l.b16 %v337
        %v648 = vunpack.c.h.b16 %v337
        %v649 = vunpack.c.l.b16 %v338
        %v650 = vunpack.c.h.b16 %v338
        %v651 = vunpack.c.l.b16 %v339
        %v652 = vunpack.c.h.b16 %v339
        %v653 = vunpack.c.l.b16 %v340
        %v654 = vunpack.c.h.b16 %v340
        %v655 = vunpack.c.l.b16 %v341
        %v656 = vunpack.c.h.b16 %v341
        %v657 = vunpack.c.l.b16 %v342
        %v658 = vunpack.c.h.b16 %v342
        %v659 = vunpack.c.l.b16 %v343
        %v660 = vunpack.c.h.b16 %v343
        %v661 = vunpack.c.l.b16 %v344
        %v662 = vunpack.c.h.b16 %v344
        %v663 = vunpack.c.l.b16 %v345
        %v664 = vunpack.c.h.b16 %v345
        %v665 = vunpack.c.l.b16 %v346
        %v666 = vunpack.c.h.b16 %v346
        %v667 = vunpack.c.l.b16 %v347
        %v668 = vunpack.c.h.b16 %v347
        %v669 = vunpack.c.l.b16 %v348
        %v670 = vunpack.c.h.b16 %v348
        %v671 = vunpack.c.l.b16 %v349
        %v672 = vunpack.c.h.b16 %v349
        %v673 = vunpack.c.l.b16 %v350
        %v674 = vunpack.c.h.b16 %v350
        %v675 = vunpack.c.l.b16 %v351
        %v676 = vunpack.c.h.b16 %v351
        %v677 = vunpack.c.l.b16 %v352
        %v678 = vunpack.c.h.b16 %v352
        %v679 = vunpack.c.l.b16 %v353
        %v680 = vunpack.c.h.b16 %v353
        %v681 = vunpack.c.l.b16 %v354
        %v682 = vunpack.c.h.b16 %v354
        %v683 = vunpack.c.l.b16 %v355
        %v684 = vunpack.c.h.b16 %v355
        %v685 = vunpack.c.l.b16 %v356
        %v686 = vunpack.c.h.b16 %v356
        %v687 = vunpack.c.l.b16 %v357
        %v688 = vunpack.c.h.b16 %v357
        %v689 = vunpack.c.l.b16 %v358
        %v690 = vunpack.c.h.b16 %v358
        %v691 = vunpack.c.l.b16 %v359
        %v692 = vunpack.c.h.b16 %v359
        %v693 = vunpack.c.l.b16 %v360
        %v694 = vunpack.c.h.b16 %v360
        %v695 = vunpack.c.l.b16 %v361
        %v696 = vunpack.c.h.b16 %v361
        %v697 = vunpack.c.l.b16 %v362
        %v698 = vunpack.c.h.b16 %v362
        %v699 = vunpack.c.l.b16 %v363
        %v700 = vunpack.c.h.b16 %v363
        %v701 = vunpack.c.l.b16 %v364
        %v702 = vunpack.c.h.b16 %v364
        %v703 = vunpack.c.l.b16 %v365
        %v704 = vunpack.c.h.b16 %v365
        %v705 = vunpack.c.l.b16 %v366
        %v706 = vunpack.c.h.b16 %v366
        %v707 = vunpack.c.l.b16 %v367
        %v708 = vunpack.c.h.b16 %v367
        %v709 = vunpack.c.l.b16 %v368
        %v710 = vunpack.c.h.b16 %v368
        %v711 = vunpack.c.l.b16 %v369
        %v712 = vunpack.c.h.b16 %v369
        %v713 = vunpack.c.l.b16 %v370
        %v714 = vunpack.c.h.b16 %v370
        %v715 = vunpack.c.l.b16 %v371
        %v716 = vunpack.c.h.b16 %v371
        %v717 = vunpack.c.l.b16 %v372
        %v718 = vunpack.c.h.b16 %v372
        %v719 = vunpack.c.l.b16 %v373
        %v720 = vunpack.c.h.b16 %v373
        %v721 = vunpack.c.l.b16 %v374
        %v722 = vunpack.c.h.b16 %v374
        %v723 = vunpack.c.l.b16 %v375
        %v724 = vunpack.c.h.b16 %v375
        %v725 = vunpack.c.l.b16 %v376
        %v726 = vunpack.c.h.b16 %v376
        %v727 = vunpack.c.l.b16 %v377
        %v728 = vunpack.c.h.b16 %v377
        %v729 = vunpack.c.l.b16 %v378
        %v730 = vunpack.c.h.b16 %v378
        %v731 = vunpack.c.l.b16 %v379
        %v732 = vunpack.c.h.b16 %v379
        %v733 = vunpack.c.l.b16 %v380
        %v734 = vunpack.c.h.b16 %v380
        %v735 = vunpack.c.l.b16 %v381
        %v736 = vunpack.c.h.b16 %v381
        %v737 = vunpack.c.l.b16 %v382
        %v738 = vunpack.c.h.b16 %v382
        %v739 = vunpack.c.l.b16 %v383
        %v740 = vunpack.c.h.b16 %v383
        %v741 = vunpack.c.l.b16 %v384
        %v742 = vunpack.c.h.b16 %v384
        %v743 = vunpack.c.l.b16 %v385
        %v744 = vunpack.c.h.b16 %v385
        %v745 = vunpack.c.l.b16 %v386
        %v746 = vunpack.c.h.b16 %v386
        %v747 = vunpack.c.l.b16 %v387
        %v748 = vunpack.c.h.b16 %v387
        %v749 = vunpack.c.l.b16 %v388
        %v750 = vunpack.c.h.b16 %v388
        %v751 = vunpack.c.l.b16 %v389
        %v752 = vunpack.c.h.b16 %v389
        %v753 = vunpack.c.l.b16 %v390
        %v754 = vunpack.c.h.b16 %v390
        %v755 = vunpack.c.l.b16 %v391
        %v756 = vunpack.c.h.b16 %v391
        %v757 = vunpack.c.l.b16 %v392
        %v758 = vunpack.c.h.b16 %v392
        %v759 = vunpack.c.l.b16 %v393
        %v760 = vunpack.c.h.b16 %v393
        %v761 = vunpack.c.l.b16 %v394
        %v762 = vunpack.c.h.b16 %v394
        %v763 = vunpack.c.l.b16 %v395
        %v764 = vunpack.c.h.b16 %v395
        %v765 = vunpack.c.l.b16 %v396
        %v766 = vunpack.c.h.b16 %v396
        %v767 = vunpack.c.l.b16 %v397
        %v768 = vunpack.c.h.b16 %v397
        %v769 = vunpack.c.l.b16 %v398
        %v770 = vunpack.c.h.b16 %v398
        %v771 = vunpack.c.l.b16 %v399
        %v772 = vunpack.c.h.b16 %v399
        %v773 = vunpack.c.l.b16 %v400
        %v774 = vunpack.c.h.b16 %v400
        %v775 = vunpack.c.l.b16 %v401
        %v776 = vunpack.c.h.b16 %v401
        %v777 = vunpack.c.l.b16 %v402
        %v778 = vunpack.c.h.b16 %v402
        %v779 = vunpack.c.l.b16 %v403
        %v780 = vunpack.c.h.b16 %v403
        %v781 = vunpack.c.l.b16 %v404
        %v782 = vunpack.c.h.b16 %v404
        %v783 = vunpack.c.l.b16 %v405
        %v784 = vunpack.c.h.b16 %v405
        %v785 = vunpack.c.l.b16 %v406
        %v786 = vunpack.c.h.b16 %v406
        %v787 = vunpack.c.l.b16 %v407
        %v788 = vunpack.c.h.b16 %v407
        %v789 = vunpack.c.l.b16 %v408
        %v790 = vunpack.c.h.b16 %v408
        %v791 = vunpack.c.l.b16 %v409
        %v792 = vunpack.c.h.b16 %v409
        %v793 = vunpack.c.l.b16 %v410
        %v794 = vunpack.c.h.b16 %v410
        %v795 = vunpack.c.l.b16 %v411
        %v796 = vunpack.c.h.b16 %v411
        %v797 = vunpack.c.l.b16 %v412
        %v798 = vunpack.c.h.b16 %v412
        %v799 = vunpack.c.l.b16 %v413
        %v800 = vunpack.c.h.b16 %v413
        %v801 = vunpack.c.l.b16 %v414
        %v802 = vunpack.c.h.b16 %v414
        %v803 = vunpack.c.l.b16 %v415
        %v804 = vunpack.c.h.b16 %v415
        %v805 = vunpack.c.l.b16 %v416
        %v806 = vunpack.c.h.b16 %v416
        %v807 = vunpack.c.l.b16 %v417
        %v808 = vunpack.c.h.b16 %v417
        %v809 = vunpack.c.l.b16 %v418
        %v810 = vunpack.c.h.b16 %v418
        %v811 = vunpack.c.l.b16 %v419
        %v812 = vunpack.c.h.b16 %v419
        %v813 = vunpack.c.l.b16 %v420
        %v814 = vunpack.c.h.b16 %v420
        %v815 = vunpack.c.l.b16 %v421
        %v816 = vunpack.c.h.b16 %v421
        %v817 = vunpack.c.l.b16 %v422
        %v818 = vunpack.c.h.b16 %v422
        %v819 = vunpack.c.l.b16 %v423
        %v820 = vunpack.c.h.b16 %v423
        %v821 = vunpack.c.l.b16 %v424
        %v822 = vunpack.c.h.b16 %v424
        %v823 = vunpack.c.l.b16 %v425
        %v824 = vunpack.c.h.b16 %v425
        %v825 = vunpack.c.l.b16 %v426
        %v826 = vunpack.c.h.b16 %v426
        %v827 = vpack.c.b16 %v641, %v635
        %v828 = vpack.c.b16 %v642, %v636
        %v829 = vpack.c.b16 %v643, %v637
        %v830 = vpack.c.b16 %v644, %v638
        %v831 = vpack.c.b16 %v645, %v639
        %v832 = vpack.c.b16 %v646, %v640
        %v833 = vpack.c.b16 %v653, %v647
        %v834 = vpack.c.b16 %v654, %v648
        %v835 = vpack.c.b16 %v655, %v649
        %v836 = vpack.c.b16 %v656, %v650
        %v837 = vpack.c.b16 %v657, %v651
        %v838 = vpack.c.b16 %v658, %v652
        %v839 = vpack.c.b16 %v665, %v659
        %v840 = vpack.c.b16 %v666, %v660
        %v841 = vpack.c.b16 %v667, %v661
        %v842 = vpack.c.b16 %v668, %v662
        %v843 = vpack.c.b16 %v669, %v663
        %v844 = vpack.c.b16 %v670, %v664
        %v845 = vpack.c.b16 %v677, %v671
        %v846 = vpack.c.b16 %v678, %v672
        %v847 = vpack.c.b16 %v679, %v673
        %v848 = vpack.c.b16 %v680, %v674
        %v849 = vpack.c.b16 %v681, %v675
        %v850 = vpack.c.b16 %v682, %v676
        %v851 = vpack.c.b16 %v689, %v683
        %v852 = vpack.c.b16 %v690, %v684
        %v853 = vpack.c.b16 %v691, %v685
        %v854 = vpack.c.b16 %v692, %v686
        %v855 = vpack.c.b16 %v693, %v687
        %v856 = vpack.c.b16 %v694, %v688
        %v857 = vpack.c.b16 %v701, %v695
        %v858 = vpack.c.b16 %v702, %v696
        %v859 = vpack.c.b16 %v703, %v697
        %v860 = vpack.c.b16 %v704, %v698
        %v861 = vpack.c.b16 %v705, %v699
        %v862 = vpack.c.b16 %v706, %v700
        %v863 = vpack.c.b16 %v713, %v707
        %v864 = vpack.c.b16 %v714, %v708
        %v865 = vpack.c.b16 %v715, %v709
        %v866 = vpack.c.b16 %v716, %v710
        %v867 = vpack.c.b16 %v717, %v711
        %v868 = vpack.c.b16 %v718, %v712
        %v869 = vpack.c.b16 %v725, %v719
        %v870 = vpack.c.b16 %v726, %v720
        %v871 = vpack.c.b16 %v727, %v721
        %v872 = vpack.c.b16 %v728, %v722
        %v873 = vpack.c.b16 %v729, %v723
        %v874 = vpack.c.b16 %v730, %v724
        %v875 = vpack.c.b16 %v737, %v731
        %v876 = vpack.c.b16 %v738, %v732
        %v877 = vpack.c.b16 %v739, %v733
        %v878 = vpack.c.b16 %v740, %v734
        %v879 = vpack.c.b16 %v741, %v735
        %v880 = vpack.c.b16 %v742, %v736
        %v881 = vpack.c.b16 %v749, %v743
        %v882 = vpack.c.b16 %v750, %v744
        %v883 = vpack.c.b16 %v751, %v745
        %v884 = vpack.c.b16 %v752, %v746
        %v885 = vpack.c.b16 %v753, %v747
        %v886 = vpack.c.b16 %v754, %v748
        %v887 = vpack.c.b16 %v761, %v755
        %v888 = vpack.c.b16 %v762, %v756
        %v889 = vpack.c.b16 %v763, %v757
        %v890 = vpack.c.b16 %v764, %v758
        %v891 = vpack.c.b16 %v765, %v759
        %v892 = vpack.c.b16 %v766, %v760
        %v893 = vpack.c.b16 %v773, %v767
        %v894 = vpack.c.b16 %v774, %v768
        %v895 = vpack.c.b16 %v775, %v769
        %v896 = vpack.c.b16 %v776, %v770
        %v897 = vpack.c.b16 %v777, %v771
        %v898 = vpack.c.b16 %v778, %v772
        %v899 = vpack.c.b16 %v785, %v779
        %v900 = vpack.c.b16 %v786, %v780
        %v901 = vpack.c.b16 %v787, %v781
        %v902 = vpack.c.b16 %v788, %v782
        %v903 = vpack.c.b16 %v789, %v783
        %v904 = vpack.c.b16 %v790, %v784
        %v905 = vpack.c.b16 %v797, %v791
        %v906 = vpack.c.b16 %v798, %v792
        %v907 = vpack.c.b16 %v799, %v793
        %v908 = vpack.c.b16 %v800, %v794
        %v909 = vpack.c.b16 %v801, %v795
        %v910 = vpack.c.b16 %v802, %v796
        %v911 = vpack.c.b16 %v809, %v803
        %v912 = vpack.c.b16 %v810, %v804
        %v913 = vpack.c.b16 %v811, %v805
        %v914 = vpack.c.b16 %v812, %v806
        %v915 = vpack.c.b16 %v813, %v807
        %v916 = vpack.c.b16 %v814, %v808
        %v917 = vpack.c.b16 %v821, %v815
        %v918 = vpack.c.b16 %v822, %v816
        %v919 = vpack.c.b16 %v823, %v817
        %v920 = vpack.c.b16 %v824, %v818
        %v921 = vpack.c.b16 %v825, %v819
        %v922 = vpack.c.b16 %v826, %v820
        %1019 = vmatprep.subr.bf16.mxu0 %v828
        %1020 = vmatpush1.bf16.msra.mxu0 %v827
        %1021 = vmatprep.subr.bf16.mxu0 %v834
        %1022 = vmatpush1.bf16.msra.mxu0 %v833
        %1023 = vmatprep.subr.bf16.mxu0 %v840
        %1024 = vmatpush1.bf16.msra.mxu0 %v839
        %1025 = vmatprep.subr.bf16.mxu0 %v846
        %1026 = vmatpush1.bf16.msra.mxu0 %v845
        %1027 = vmatprep.subr.bf16.mxu0 %v852
        %1028 = vmatpush1.bf16.msra.mxu0 %v851
        %1029 = vmatprep.subr.bf16.mxu0 %v858
        %1030 = vmatpush1.bf16.msra.mxu0 %v857
        %1031 = vmatprep.subr.bf16.mxu0 %v864
        %1032 = vmatpush1.bf16.msra.mxu0 %v863
        %1033 = vmatprep.subr.bf16.mxu0 %v870
        %1034 = vmatpush1.bf16.msra.mxu0 %v869
        %1035 = vmatprep.subr.bf16.mxu0 %v876
        %1036 = vmatpush1.bf16.msra.mxu0 %v875
        %1037 = vmatprep.subr.bf16.mxu0 %v882
        %1038 = vmatpush1.bf16.msra.mxu0 %v881
        %1039 = vmatprep.subr.bf16.mxu0 %v888
        %1040 = vmatpush1.bf16.msra.mxu0 %v887
        %1041 = vmatprep.subr.bf16.mxu0 %v894
        %1042 = vmatpush1.bf16.msra.mxu0 %v893
        %1043 = vmatprep.subr.bf16.mxu0 %v900
        %1044 = vmatpush1.bf16.msra.mxu0 %v899
        %1045 = vmatprep.subr.bf16.mxu0 %v906
        %1046 = vmatpush1.bf16.msra.mxu0 %v905
        %1047 = vmatprep.subr.bf16.mxu0 %v912
        %1048 = vmatpush1.bf16.msra.mxu0 %v911
        %1049 = vmatprep.subr.bf16.mxu0 %v918
        %1050 = vmatpush1.bf16.msra.mxu0 %v917
        %1051 = vmatprep.mubr.bf16.mxu0 %v508
        %1052 = vmatmul.mubr.bf16.gmra.mrb[0].mxu0 %v507
        %v1053 = vpop.f32.mrb[0].mxu0
        %v1054 = vadd.f32 %v432, %v1053
        %v1055 = vpop.f32.mrb[0].mxu0
        %v1056 = vadd.f32 %v436, %v1055
        %v1057 = vpop.f32.mrb[0].mxu0
        %v1058 = vadd.f32 %v432, %v1057
        %v1059 = vpop.f32.mrb[0].mxu0
        %v1060 = vadd.f32 %v436, %v1059
        %1061 = vmatprep.mubr.bf16.mxu0 %v510
        %1062 = vmatmul.mubr.bf16.gmra.mrb[0].mxu0 %v509
        %v1063 = vpop.f32.mrb[0].mxu0
        %v1064 = vadd.f32 %v432, %v1063
        %v1065 = vpop.f32.mrb[0].mxu0
        %v1066 = vadd.f32 %v436, %v1065
        %v1067 = vpop.f32.mrb[0].mxu0
        %v1068 = vadd.f32 %v432, %v1067
        %v1069 = vpop.f32.mrb[0].mxu0
        %v1070 = vadd.f32 %v436, %v1069
        %1071 = vmatprep.mubr.bf16.mxu0 %v512
        %1072 = vmatmul.mubr.bf16.gmra.mrb[0].mxu0 %v511
        %v1073 = vpop.f32.mrb[0].mxu0
        %v1074 = vadd.f32 %v432, %v1073
        %v1075 = vpop.f32.mrb[0].mxu0
        %v1076 = vadd.f32 %v436, %v1075
        %v1077 = vpop.f32.mrb[0].mxu0
        %v1078 = vadd.f32 %v432, %v1077
        %v1079 = vpop.f32.mrb[0].mxu0
        %v1080 = vadd.f32 %v436, %v1079
        %1081 = vmatprep.mubr.bf16.mxu0 %v514
        %1082 = vmatmul.mubr.bf16.gmra.mrb[0].mxu0 %v513
        %v1083 = vpop.f32.mrb[0].mxu0
        %v1084 = vadd.f32 %v432, %v1083
        %v1085 = vpop.f32.mrb[0].mxu0
        %v1086 = vadd.f32 %v436, %v1085
        %v1087 = vpop.f32.mrb[0].mxu0
        %v1088 = vadd.f32 %v432, %v1087
        %v1089 = vpop.f32.mrb[0].mxu0
        %v1090 = vadd.f32 %v436, %v1089
        %1091 = vmatprep.mubr.bf16.mxu0 %v516
        %1092 = vmatmul.mubr.bf16.gmra.mrb[0].mxu0 %v515
        %v1093 = vpop.f32.mrb[0].mxu0
        %v1094 = vadd.f32 %v432, %v1093
        %v1095 = vpop.f32.mrb[0].mxu0
        %v1096 = vadd.f32 %v436, %v1095
        %v1097 = vpop.f32.mrb[0].mxu0
        %v1098 = vadd.f32 %v432, %v1097
        %v1099 = vpop.f32.mrb[0].mxu0
        %v1100 = vadd.f32 %v436, %v1099
        %1101 = vmatprep.mubr.bf16.mxu0 %v518
        %1102 = vmatmul.mubr.bf16.gmra.mrb[0].mxu0 %v517
        %v1103 = vpop.f32.mrb[0].mxu0
        %v1104 = vadd.f32 %v432, %v1103
        %v1105 = vpop.f32.mrb[0].mxu0
        %v1106 = vadd.f32 %v436, %v1105
        %v1107 = vpop.f32.mrb[0].mxu0
        %v1108 = vadd.f32 %v432, %v1107
        %v1109 = vpop.f32.mrb[0].mxu0
        %v1110 = vadd.f32 %v436, %v1109
        %1111 = vmatprep.mubr.bf16.mxu0 %v520
        %1112 = vmatmul.mubr.bf16.gmra.mrb[0].mxu0 %v519
        %v1113 = vpop.f32.mrb[0].mxu0
        %v1114 = vadd.f32 %v432, %v1113
        %v1115 = vpop.f32.mrb[0].mxu0
        %v1116 = vadd.f32 %v436, %v1115
        %v1117 = vpop.f32.mrb[0].mxu0
        %v1118 = vadd.f32 %v432, %v1117
        %v1119 = vpop.f32.mrb[0].mxu0
        %v1120 = vadd.f32 %v436, %v1119
        %1121 = vmatprep.mubr.bf16.mxu0 %v522
        %1122 = vmatmul.mubr.bf16.gmra.mrb[0].mxu0 %v521
        %v1123 = vpop.f32.mrb[0].mxu0
        %v1124 = vadd.f32 %v432, %v1123
        %v1125 = vpop.f32.mrb[0].mxu0
        %v1126 = vadd.f32 %v436, %v1125
        %v1127 = vpop.f32.mrb[0].mxu0
        %v1128 = vadd.f32 %v432, %v1127
        %v1129 = vpop.f32.mrb[0].mxu0
        %v1130 = vadd.f32 %v436, %v1129
        %1131 = vdwg.mxu0
        %1132 = vmatprep.subr.bf16.mxu0 %v830
        %1133 = vmatpush1.bf16.msra.mxu0 %v829
        %1134 = vmatprep.subr.bf16.mxu0 %v836
        %1135 = vmatpush1.bf16.msra.mxu0 %v835
        %1136 = vmatprep.subr.bf16.mxu0 %v842
        %1137 = vmatpush1.bf16.msra.mxu0 %v841
        %1138 = vmatprep.subr.bf16.mxu0 %v848
        %1139 = vmatpush1.bf16.msra.mxu0 %v847
        %1140 = vmatprep.subr.bf16.mxu0 %v854
        %1141 = vmatpush1.bf16.msra.mxu0 %v853
        %1142 = vmatprep.subr.bf16.mxu0 %v860
        %1143 = vmatpush1.bf16.msra.mxu0 %v859
        %1144 = vmatprep.subr.bf16.mxu0 %v866
        %1145 = vmatpush1.bf16.msra.mxu0 %v865
        %1146 = vmatprep.subr.bf16.mxu0 %v872
        %1147 = vmatpush1.bf16.msra.mxu0 %v871
        %1148 = vmatprep.subr.bf16.mxu0 %v878
        %1149 = vmatpush1.bf16.msra.mxu0 %v877
        %1150 = vmatprep.subr.bf16.mxu0 %v884
        %1151 = vmatpush1.bf16.msra.mxu0 %v883
        %1152 = vmatprep.subr.bf16.mxu0 %v890
        %1153 = vmatpush1.bf16.msra.mxu0 %v889
        %1154 = vmatprep.subr.bf16.mxu0 %v896
        %1155 = vmatpush1.bf16.msra.mxu0 %v895
        %1156 = vmatprep.subr.bf16.mxu0 %v902
        %1157 = vmatpush1.bf16.msra.mxu0 %v901
        %1158 = vmatprep.subr.bf16.mxu0 %v908
        %1159 = vmatpush1.bf16.msra.mxu0 %v907
        %1160 = vmatprep.subr.bf16.mxu0 %v914
        %1161 = vmatpush1.bf16.msra.mxu0 %v913
        %1162 = vmatprep.subr.bf16.mxu0 %v920
        %1163 = vmatpush1.bf16.msra.mxu0 %v919
        %1164 = vmatprep.mubr.bf16.mxu0 %v508
        %1165 = vmatmul.mubr.bf16.gmra.mrb[0].mxu0 %v507
        %v1166 = vpop.f32.mrb[0].mxu0
        %v1167 = vadd.f32 %v440, %v1166
        %v1168 = vpop.f32.mrb[0].mxu0
        %v1169 = vadd.f32 %v444, %v1168
        %v1170 = vpop.f32.mrb[0].mxu0
        %v1171 = vadd.f32 %v440, %v1170
        %v1172 = vpop.f32.mrb[0].mxu0
        %v1173 = vadd.f32 %v444, %v1172
        %1174 = vmatprep.mubr.bf16.mxu0 %v510
        %1175 = vmatmul.mubr.bf16.gmra.mrb[0].mxu0 %v509
        %v1176 = vpop.f32.mrb[0].mxu0
        %v1177 = vadd.f32 %v440, %v1176
        %v1178 = vpop.f32.mrb[0].mxu0
        %v1179 = vadd.f32 %v444, %v1178
        %v1180 = vpop.f32.mrb[0].mxu0
        %v1181 = vadd.f32 %v440, %v1180
        %v1182 = vpop.f32.mrb[0].mxu0
        %v1183 = vadd.f32 %v444, %v1182
        %1184 = vmatprep.mubr.bf16.mxu0 %v512
        %1185 = vmatmul.mubr.bf16.gmra.mrb[0].mxu0 %v511
        %v1186 = vpop.f32.mrb[0].mxu0
        %v1187 = vadd.f32 %v440, %v1186
        %v1188 = vpop.f32.mrb[0].mxu0
        %v1189 = vadd.f32 %v444, %v1188
        %v1190 = vpop.f32.mrb[0].mxu0
        %v1191 = vadd.f32 %v440, %v1190
        %v1192 = vpop.f32.mrb[0].mxu0
        %v1193 = vadd.f32 %v444, %v1192
        %1194 = vmatprep.mubr.bf16.mxu0 %v514
        %1195 = vmatmul.mubr.bf16.gmra.mrb[0].mxu0 %v513
        %v1196 = vpop.f32.mrb[0].mxu0
        %v1197 = vadd.f32 %v440, %v1196
        %v1198 = vpop.f32.mrb[0].mxu0
        %v1199 = vadd.f32 %v444, %v1198
        %v1200 = vpop.f32.mrb[0].mxu0
        %v1201 = vadd.f32 %v440, %v1200
        %v1202 = vpop.f32.mrb[0].mxu0
        %v1203 = vadd.f32 %v444, %v1202
        %1204 = vmatprep.mubr.bf16.mxu0 %v516
        %1205 = vmatmul.mubr.bf16.gmra.mrb[0].mxu0 %v515
        %v1206 = vpop.f32.mrb[0].mxu0
        %v1207 = vadd.f32 %v440, %v1206
        %v1208 = vpop.f32.mrb[0].mxu0
        %v1209 = vadd.f32 %v444, %v1208
        %v1210 = vpop.f32.mrb[0].mxu0
        %v1211 = vadd.f32 %v440, %v1210
        %v1212 = vpop.f32.mrb[0].mxu0
        %v1213 = vadd.f32 %v444, %v1212
        %1214 = vmatprep.mubr.bf16.mxu0 %v518
        %1215 = vmatmul.mubr.bf16.gmra.mrb[0].mxu0 %v517
        %v1216 = vpop.f32.mrb[0].mxu0
        %v1217 = vadd.f32 %v440, %v1216
        %v1218 = vpop.f32.mrb[0].mxu0
        %v1219 = vadd.f32 %v444, %v1218
        %v1220 = vpop.f32.mrb[0].mxu0
        %v1221 = vadd.f32 %v440, %v1220
        %v1222 = vpop.f32.mrb[0].mxu0
        %v1223 = vadd.f32 %v444, %v1222
        %1224 = vmatprep.mubr.bf16.mxu0 %v520
        %1225 = vmatmul.mubr.bf16.gmra.mrb[0].mxu0 %v519
        %v1226 = vpop.f32.mrb[0].mxu0
        %v1227 = vadd.f32 %v440, %v1226
        %v1228 = vpop.f32.mrb[0].mxu0
        %v1229 = vadd.f32 %v444, %v1228
        %v1230 = vpop.f32.mrb[0].mxu0
        %v1231 = vadd.f32 %v440, %v1230
        %v1232 = vpop.f32.mrb[0].mxu0
        %v1233 = vadd.f32 %v444, %v1232
        %1234 = vmatprep.mubr.bf16.mxu0 %v522
        %1235 = vmatmul.mubr.bf16.gmra.mrb[0].mxu0 %v521
        %v1236 = vpop.f32.mrb[0].mxu0
        %v1237 = vadd.f32 %v440, %v1236
        %v1238 = vpop.f32.mrb[0].mxu0
        %v1239 = vadd.f32 %v444, %v1238
        %v1240 = vpop.f32.mrb[0].mxu0
        %v1241 = vadd.f32 %v440, %v1240
        %v1242 = vpop.f32.mrb[0].mxu0
        %v1243 = vadd.f32 %v444, %v1242
        %1244 = vdwg.mxu0
        %1245 = vmatprep.subr.bf16.mxu0 %v832
        %1246 = vmatpush1.bf16.msra.mxu0 %v831
        %1247 = vmatprep.subr.bf16.mxu0 %v838
        %1248 = vmatpush1.bf16.msra.mxu0 %v837
        %1249 = vmatprep.subr.bf16.mxu0 %v844
        %1250 = vmatpush1.bf16.msra.mxu0 %v843
        %1251 = vmatprep.subr.bf16.mxu0 %v850
        %1252 = vmatpush1.bf16.msra.mxu0 %v849
        %1253 = vmatprep.subr.bf16.mxu0 %v856
        %1254 = vmatpush1.bf16.msra.mxu0 %v855
        %1255 = vmatprep.subr.bf16.mxu0 %v862
        %1256 = vmatpush1.bf16.msra.mxu0 %v861
        %1257 = vmatprep.subr.bf16.mxu0 %v868
        %1258 = vmatpush1.bf16.msra.mxu0 %v867
        %1259 = vmatprep.subr.bf16.mxu0 %v874
        %1260 = vmatpush1.bf16.msra.mxu0 %v873
        %1261 = vmatprep.subr.bf16.mxu0 %v880
        %1262 = vmatpush1.bf16.msra.mxu0 %v879
        %1263 = vmatprep.subr.bf16.mxu0 %v886
        %1264 = vmatpush1.bf16.msra.mxu0 %v885
        %1265 = vmatprep.subr.bf16.mxu0 %v892
        %1266 = vmatpush1.bf16.msra.mxu0 %v891
        %1267 = vmatprep.subr.bf16.mxu0 %v898
        %1268 = vmatpush1.bf16.msra.mxu0 %v897
        %1269 = vmatprep.subr.bf16.mxu0 %v904
        %1270 = vmatpush1.bf16.msra.mxu0 %v903
        %1271 = vmatprep.subr.bf16.mxu0 %v910
        %1272 = vmatpush1.bf16.msra.mxu0 %v909
        %1273 = vmatprep.subr.bf16.mxu0 %v916
        %1274 = vmatpush1.bf16.msra.mxu0 %v915
        %1275 = vmatprep.subr.bf16.mxu0 %v922
        %1276 = vmatpush1.bf16.msra.mxu0 %v921
        %1277 = vmatprep.mubr.bf16.mxu0 %v508
        %1278 = vmatmul.mubr.bf16.gmra.mrb[0].mxu0 %v507
        %v1279 = vpop.f32.mrb[0].mxu0
        %v1280 = vadd.f32 %v448, %v1279
        %v1281 = vpop.f32.mrb[0].mxu0
        %v1282 = vadd.f32 %v452, %v1281
        %v1283 = vpop.f32.mrb[0].mxu0
        %v1284 = vadd.f32 %v448, %v1283
        %v1285 = vpop.f32.mrb[0].mxu0
        %v1286 = vadd.f32 %v452, %v1285
        %1287 = vmatprep.mubr.bf16.mxu0 %v510
        %1288 = vmatmul.mubr.bf16.gmra.mrb[0].mxu0 %v509
        %v1289 = vpop.f32.mrb[0].mxu0
        %v1290 = vadd.f32 %v448, %v1289
        %v1291 = vpop.f32.mrb[0].mxu0
        %v1292 = vadd.f32 %v452, %v1291
        %v1293 = vpop.f32.mrb[0].mxu0
        %v1294 = vadd.f32 %v448, %v1293
        %v1295 = vpop.f32.mrb[0].mxu0
        %v1296 = vadd.f32 %v452, %v1295
        %1297 = vmatprep.mubr.bf16.mxu0 %v512
        %1298 = vmatmul.mubr.bf16.gmra.mrb[0].mxu0 %v511
        %v1299 = vpop.f32.mrb[0].mxu0
        %v1300 = vadd.f32 %v448, %v1299
        %v1301 = vpop.f32.mrb[0].mxu0
        %v1302 = vadd.f32 %v452, %v1301
        %v1303 = vpop.f32.mrb[0].mxu0
        %v1304 = vadd.f32 %v448, %v1303
        %v1305 = vpop.f32.mrb[0].mxu0
        %v1306 = vadd.f32 %v452, %v1305
        %1307 = vmatprep.mubr.bf16.mxu0 %v514
        %1308 = vmatmul.mubr.bf16.gmra.mrb[0].mxu0 %v513
        %v1309 = vpop.f32.mrb[0].mxu0
        %v1310 = vadd.f32 %v448, %v1309
        %v1311 = vpop.f32.mrb[0].mxu0
        %v1312 = vadd.f32 %v452, %v1311
        %v1313 = vpop.f32.mrb[0].mxu0
        %v1314 = vadd.f32 %v448, %v1313
        %v1315 = vpop.f32.mrb[0].mxu0
        %v1316 = vadd.f32 %v452, %v1315
        %1317 = vmatprep.mubr.bf16.mxu0 %v516
        %1318 = vmatmul.mubr.bf16.gmra.mrb[0].mxu0 %v515
        %v1319 = vpop.f32.mrb[0].mxu0
        %v1320 = vadd.f32 %v448, %v1319
        %v1321 = vpop.f32.mrb[0].mxu0
        %v1322 = vadd.f32 %v452, %v1321
        %v1323 = vpop.f32.mrb[0].mxu0
        %v1324 = vadd.f32 %v448, %v1323
        %v1325 = vpop.f32.mrb[0].mxu0
        %v1326 = vadd.f32 %v452, %v1325
        %1327 = vmatprep.mubr.bf16.mxu0 %v518
        %1328 = vmatmul.mubr.bf16.gmra.mrb[0].mxu0 %v517
        %v1329 = vpop.f32.mrb[0].mxu0
        %v1330 = vadd.f32 %v448, %v1329
        %v1331 = vpop.f32.mrb[0].mxu0
        %v1332 = vadd.f32 %v452, %v1331
        %v1333 = vpop.f32.mrb[0].mxu0
        %v1334 = vadd.f32 %v448, %v1333
        %v1335 = vpop.f32.mrb[0].mxu0
        %v1336 = vadd.f32 %v452, %v1335
        %1337 = vmatprep.mubr.bf16.mxu0 %v520
        %1338 = vmatmul.mubr.bf16.gmra.mrb[0].mxu0 %v519
        %v1339 = vpop.f32.mrb[0].mxu0
        %v1340 = vadd.f32 %v448, %v1339
        %v1341 = vpop.f32.mrb[0].mxu0
        %v1342 = vadd.f32 %v452, %v1341
        %v1343 = vpop.f32.mrb[0].mxu0
        %v1344 = vadd.f32 %v448, %v1343
        %v1345 = vpop.f32.mrb[0].mxu0
        %v1346 = vadd.f32 %v452, %v1345
        %1347 = vmatprep.mubr.bf16.mxu0 %v522
        %1348 = vmatmul.mubr.bf16.gmra.mrb[0].mxu0 %v521
        %v1349 = vpop.f32.mrb[0].mxu0
        %v1350 = vadd.f32 %v448, %v1349
        %v1351 = vpop.f32.mrb[0].mxu0
        %v1352 = vadd.f32 %v452, %v1351
        %v1353 = vpop.f32.mrb[0].mxu0
        %v1354 = vadd.f32 %v448, %v1353
        %v1355 = vpop.f32.mrb[0].mxu0
        %v1356 = vadd.f32 %v452, %v1355
        %1357 = vdwg.mxu0
        %v1358 = vpack.c.bf16 %v1058, %v1054
        %v1359 = vpack.c.bf16 %v1068, %v1064
        %v1360 = vpack.c.bf16 %v1078, %v1074
        %v1361 = vpack.c.bf16 %v1088, %v1084
        %v1362 = vpack.c.bf16 %v1098, %v1094
        %v1363 = vpack.c.bf16 %v1108, %v1104
        %v1364 = vpack.c.bf16 %v1118, %v1114
        %v1365 = vpack.c.bf16 %v1128, %v1124
        %v1374 = vunpack.c.l.b16 %v1358
        %v1375 = vunpack.c.h.b16 %v1358
        %v1376 = vunpack.c.l.b16 %v1359
        %v1377 = vunpack.c.h.b16 %v1359
        %v1378 = vunpack.c.l.b16 %v1360
        %v1379 = vunpack.c.h.b16 %v1360
        %v1380 = vunpack.c.l.b16 %v1361
        %v1381 = vunpack.c.h.b16 %v1361
        %v1382 = vunpack.c.l.b16 %v1362
        %v1383 = vunpack.c.h.b16 %v1362
        %v1384 = vunpack.c.l.b16 %v1363
        %v1385 = vunpack.c.h.b16 %v1363
        %v1386 = vunpack.c.l.b16 %v1364
        %v1387 = vunpack.c.h.b16 %v1364
        %v1388 = vunpack.c.l.b16 %v1365
        %v1389 = vunpack.c.h.b16 %v1365
        %v1390 = vpack.c.b16 %v1374, %v1374
        %v1391 = vpack.c.b16 %v1375, %v1375
        %v1392 = vpack.c.b16 %v1376, %v1376
        %v1393 = vpack.c.b16 %v1377, %v1377
        %v1394 = vpack.c.b16 %v1378, %v1378
        %v1395 = vpack.c.b16 %v1379, %v1379
        %v1396 = vpack.c.b16 %v1380, %v1380
        %v1397 = vpack.c.b16 %v1381, %v1381
        %v1398 = vpack.c.b16 %v1382, %v1382
        %v1399 = vpack.c.b16 %v1383, %v1383
        %v1400 = vpack.c.b16 %v1384, %v1384
        %v1401 = vpack.c.b16 %v1385, %v1385
        %v1402 = vpack.c.b16 %v1386, %v1386
        %v1403 = vpack.c.b16 %v1387, %v1387
        %v1404 = vpack.c.b16 %v1388, %v1388
        %v1405 = vpack.c.b16 %v1389, %v1389
        %1422 = vst [vmem:[%s296] sm:$0xf] %v1390
        %1423 = vst [vmem:[%s296 + $0x4] sm:$0xf] %v1391
        %1424 = vst [vmem:[%s296 + $0x8] sm:$0xf] %v1392
        %1425 = vst [vmem:[%s296 + $0xc] sm:$0xf] %v1393
        %1426 = vst [vmem:[%s296 + $0x10] sm:$0xf] %v1394
        %1427 = vst [vmem:[%s296 + $0x14] sm:$0xf] %v1395
        %1428 = vst [vmem:[%s296 + $0x18] sm:$0xf] %v1396
        %1429 = vst [vmem:[%s296 + $0x1c] sm:$0xf] %v1397
        %1430 = vst [vmem:[%s296 + $0x20] sm:$0xf] %v1398
        %1431 = vst [vmem:[%s296 + $0x24] sm:$0xf] %v1399
        %1432 = vst [vmem:[%s296 + $0x28] sm:$0xf] %v1400
        %1433 = vst [vmem:[%s296 + $0x2c] sm:$0xf] %v1401
        %1434 = vst [vmem:[%s296 + $0x30] sm:$0xf] %v1402
        %1435 = vst [vmem:[%s296 + $0x34] sm:$0xf] %v1403
        %1436 = vst [vmem:[%s296 + $0x38] sm:$0xf] %v1404
        %1437 = vst [vmem:[%s296 + $0x3c] sm:$0xf] %v1405
        %v1438 = vpack.c.bf16 %v1171, %v1167
        %v1439 = vpack.c.bf16 %v1181, %v1177
        %v1440 = vpack.c.bf16 %v1191, %v1187
        %v1441 = vpack.c.bf16 %v1201, %v1197
        %v1442 = vpack.c.bf16 %v1211, %v1207
        %v1443 = vpack.c.bf16 %v1221, %v1217
        %v1444 = vpack.c.bf16 %v1231, %v1227
        %v1445 = vpack.c.bf16 %v1241, %v1237
        %v1454 = vunpack.c.l.b16 %v1438
        %v1455 = vunpack.c.h.b16 %v1438
        %v1456 = vunpack.c.l.b16 %v1439
        %v1457 = vunpack.c.h.b16 %v1439
        %v1458 = vunpack.c.l.b16 %v1440
        %v1459 = vunpack.c.h.b16 %v1440
        %v1460 = vunpack.c.l.b16 %v1441
        %v1461 = vunpack.c.h.b16 %v1441
        %v1462 = vunpack.c.l.b16 %v1442
        %v1463 = vunpack.c.h.b16 %v1442
        %v1464 = vunpack.c.l.b16 %v1443
        %v1465 = vunpack.c.h.b16 %v1443
        %v1466 = vunpack.c.l.b16 %v1444
        %v1467 = vunpack.c.h.b16 %v1444
        %v1468 = vunpack.c.l.b16 %v1445
        %v1469 = vunpack.c.h.b16 %v1445
        %v1470 = vpack.c.b16 %v1454, %v1454
        %v1471 = vpack.c.b16 %v1455, %v1455
        %v1472 = vpack.c.b16 %v1456, %v1456
        %v1473 = vpack.c.b16 %v1457, %v1457
        %v1474 = vpack.c.b16 %v1458, %v1458
        %v1475 = vpack.c.b16 %v1459, %v1459
        %v1476 = vpack.c.b16 %v1460, %v1460
        %v1477 = vpack.c.b16 %v1461, %v1461
        %v1478 = vpack.c.b16 %v1462, %v1462
        %v1479 = vpack.c.b16 %v1463, %v1463
        %v1480 = vpack.c.b16 %v1464, %v1464
        %v1481 = vpack.c.b16 %v1465, %v1465
        %v1482 = vpack.c.b16 %v1466, %v1466
        %v1483 = vpack.c.b16 %v1467, %v1467
        %v1484 = vpack.c.b16 %v1468, %v1468
        %v1485 = vpack.c.b16 %v1469, %v1469
        %1502 = vst [vmem:[%s303] sm:$0xf] %v1470
        %1503 = vst [vmem:[%s303 + $0x4] sm:$0xf] %v1471
        %1504 = vst [vmem:[%s303 + $0x8] sm:$0xf] %v1472
        %1505 = vst [vmem:[%s303 + $0xc] sm:$0xf] %v1473
        %1506 = vst [vmem:[%s303 + $0x10] sm:$0xf] %v1474
        %1507 = vst [vmem:[%s303 + $0x14] sm:$0xf] %v1475
        %1508 = vst [vmem:[%s303 + $0x18] sm:$0xf] %v1476
        %1509 = vst [vmem:[%s303 + $0x1c] sm:$0xf] %v1477
        %1510 = vst [vmem:[%s303 + $0x20] sm:$0xf] %v1478
        %1511 = vst [vmem:[%s303 + $0x24] sm:$0xf] %v1479
        %1512 = vst [vmem:[%s303 + $0x28] sm:$0xf] %v1480
        %1513 = vst [vmem:[%s303 + $0x2c] sm:$0xf] %v1481
        %1514 = vst [vmem:[%s303 + $0x30] sm:$0xf] %v1482
        %1515 = vst [vmem:[%s303 + $0x34] sm:$0xf] %v1483
        %1516 = vst [vmem:[%s303 + $0x38] sm:$0xf] %v1484
        %1517 = vst [vmem:[%s303 + $0x3c] sm:$0xf] %v1485
        %v1518 = vpack.c.bf16 %v1284, %v1280
        %v1519 = vpack.c.bf16 %v1294, %v1290
        %v1520 = vpack.c.bf16 %v1304, %v1300
        %v1521 = vpack.c.bf16 %v1314, %v1310
        %v1522 = vpack.c.bf16 %v1324, %v1320
        %v1523 = vpack.c.bf16 %v1334, %v1330
        %v1524 = vpack.c.bf16 %v1344, %v1340
        %v1525 = vpack.c.bf16 %v1354, %v1350
        %v1534 = vunpack.c.l.b16 %v1518
        %v1535 = vunpack.c.h.b16 %v1518
        %v1536 = vunpack.c.l.b16 %v1519
        %v1537 = vunpack.c.h.b16 %v1519
        %v1538 = vunpack.c.l.b16 %v1520
        %v1539 = vunpack.c.h.b16 %v1520
        %v1540 = vunpack.c.l.b16 %v1521
        %v1541 = vunpack.c.h.b16 %v1521
        %v1542 = vunpack.c.l.b16 %v1522
        %v1543 = vunpack.c.h.b16 %v1522
        %v1544 = vunpack.c.l.b16 %v1523
        %v1545 = vunpack.c.h.b16 %v1523
        %v1546 = vunpack.c.l.b16 %v1524
        %v1547 = vunpack.c.h.b16 %v1524
        %v1548 = vunpack.c.l.b16 %v1525
        %v1549 = vunpack.c.h.b16 %v1525
        %v1550 = vpack.c.b16 %v1534, %v1534
        %v1551 = vpack.c.b16 %v1535, %v1535
        %v1552 = vpack.c.b16 %v1536, %v1536
        %v1553 = vpack.c.b16 %v1537, %v1537
        %v1554 = vpack.c.b16 %v1538, %v1538
        %v1555 = vpack.c.b16 %v1539, %v1539
        %v1556 = vpack.c.b16 %v1540, %v1540
        %v1557 = vpack.c.b16 %v1541, %v1541
        %v1558 = vpack.c.b16 %v1542, %v1542
        %v1559 = vpack.c.b16 %v1543, %v1543
        %v1560 = vpack.c.b16 %v1544, %v1544
        %v1561 = vpack.c.b16 %v1545, %v1545
        %v1562 = vpack.c.b16 %v1546, %v1546
        %v1563 = vpack.c.b16 %v1547, %v1547
        %v1564 = vpack.c.b16 %v1548, %v1548
        %v1565 = vpack.c.b16 %v1549, %v1549
        %1582 = vst [vmem:[%s310] sm:$0xf] %v1550
        %1583 = vst [vmem:[%s310 + $0x4] sm:$0xf] %v1551
        %1584 = vst [vmem:[%s310 + $0x8] sm:$0xf] %v1552
        %1585 = vst [vmem:[%s310 + $0xc] sm:$0xf] %v1553
        %1586 = vst [vmem:[%s310 + $0x10] sm:$0xf] %v1554
        %1587 = vst [vmem:[%s310 + $0x14] sm:$0xf] %v1555
        %1588 = vst [vmem:[%s310 + $0x18] sm:$0xf] %v1556
        %1589 = vst [vmem:[%s310 + $0x1c] sm:$0xf] %v1557
        %1590 = vst [vmem:[%s310 + $0x20] sm:$0xf] %v1558
        %1591 = vst [vmem:[%s310 + $0x24] sm:$0xf] %v1559
        %1592 = vst [vmem:[%s310 + $0x28] sm:$0xf] %v1560
        %1593 = vst [vmem:[%s310 + $0x2c] sm:$0xf] %v1561
        %1594 = vst [vmem:[%s310 + $0x30] sm:$0xf] %v1562
        %1595 = vst [vmem:[%s310 + $0x34] sm:$0xf] %v1563
        %1596 = vst [vmem:[%s310 + $0x38] sm:$0xf] %v1564
        %1597 = vst [vmem:[%s310 + $0x3c] sm:$0xf] %v1565
        %v1598 = vpack.c.bf16 %v1060, %v1056
        %v1599 = vpack.c.bf16 %v1070, %v1066
        %v1600 = vpack.c.bf16 %v1080, %v1076
        %v1601 = vpack.c.bf16 %v1090, %v1086
        %v1602 = vpack.c.bf16 %v1100, %v1096
        %v1603 = vpack.c.bf16 %v1110, %v1106
        %v1604 = vpack.c.bf16 %v1120, %v1116
        %v1605 = vpack.c.bf16 %v1130, %v1126
        %v1614 = vunpack.c.l.b16 %v1598
        %v1615 = vunpack.c.h.b16 %v1598
        %v1616 = vunpack.c.l.b16 %v1599
        %v1617 = vunpack.c.h.b16 %v1599
        %v1618 = vunpack.c.l.b16 %v1600
        %v1619 = vunpack.c.h.b16 %v1600
        %v1620 = vunpack.c.l.b16 %v1601
        %v1621 = vunpack.c.h.b16 %v1601
        %v1622 = vunpack.c.l.b16 %v1602
        %v1623 = vunpack.c.h.b16 %v1602
        %v1624 = vunpack.c.l.b16 %v1603
        %v1625 = vunpack.c.h.b16 %v1603
        %v1626 = vunpack.c.l.b16 %v1604
        %v1627 = vunpack.c.h.b16 %v1604
        %v1628 = vunpack.c.l.b16 %v1605
        %v1629 = vunpack.c.h.b16 %v1605
        %v1630 = vpack.c.b16 %v1614, %v1614
        %v1631 = vpack.c.b16 %v1615, %v1615
        %v1632 = vpack.c.b16 %v1616, %v1616
        %v1633 = vpack.c.b16 %v1617, %v1617
        %v1634 = vpack.c.b16 %v1618, %v1618
        %v1635 = vpack.c.b16 %v1619, %v1619
        %v1636 = vpack.c.b16 %v1620, %v1620
        %v1637 = vpack.c.b16 %v1621, %v1621
        %v1638 = vpack.c.b16 %v1622, %v1622
        %v1639 = vpack.c.b16 %v1623, %v1623
        %v1640 = vpack.c.b16 %v1624, %v1624
        %v1641 = vpack.c.b16 %v1625, %v1625
        %v1642 = vpack.c.b16 %v1626, %v1626
        %v1643 = vpack.c.b16 %v1627, %v1627
        %v1644 = vpack.c.b16 %v1628, %v1628
        %v1645 = vpack.c.b16 %v1629, %v1629
        %s1662 = scalar_lea.vmem %s296, 64 [#allocation8]
        %1663 = vst [vmem:[%s1662] sm:$0xf] %v1630
        %1664 = vst [vmem:[%s1662 + $0x4] sm:$0xf] %v1631
        %1665 = vst [vmem:[%s1662 + $0x8] sm:$0xf] %v1632
        %1666 = vst [vmem:[%s1662 + $0xc] sm:$0xf] %v1633
        %1667 = vst [vmem:[%s1662 + $0x10] sm:$0xf] %v1634
        %1668 = vst [vmem:[%s1662 + $0x14] sm:$0xf] %v1635
        %1669 = vst [vmem:[%s1662 + $0x18] sm:$0xf] %v1636
        %1670 = vst [vmem:[%s1662 + $0x1c] sm:$0xf] %v1637
        %1671 = vst [vmem:[%s1662 + $0x20] sm:$0xf] %v1638
        %1672 = vst [vmem:[%s1662 + $0x24] sm:$0xf] %v1639
        %1673 = vst [vmem:[%s1662 + $0x28] sm:$0xf] %v1640
        %1674 = vst [vmem:[%s1662 + $0x2c] sm:$0xf] %v1641
        %1675 = vst [vmem:[%s1662 + $0x30] sm:$0xf] %v1642
        %1676 = vst [vmem:[%s1662 + $0x34] sm:$0xf] %v1643
        %1677 = vst [vmem:[%s1662 + $0x38] sm:$0xf] %v1644
        %1678 = vst [vmem:[%s1662 + $0x3c] sm:$0xf] %v1645
        %v1679 = vpack.c.bf16 %v1173, %v1169
        %v1680 = vpack.c.bf16 %v1183, %v1179
        %v1681 = vpack.c.bf16 %v1193, %v1189
        %v1682 = vpack.c.bf16 %v1203, %v1199
        %v1683 = vpack.c.bf16 %v1213, %v1209
        %v1684 = vpack.c.bf16 %v1223, %v1219
        %v1685 = vpack.c.bf16 %v1233, %v1229
        %v1686 = vpack.c.bf16 %v1243, %v1239
        %v1695 = vunpack.c.l.b16 %v1679
        %v1696 = vunpack.c.h.b16 %v1679
        %v1697 = vunpack.c.l.b16 %v1680
        %v1698 = vunpack.c.h.b16 %v1680
        %v1699 = vunpack.c.l.b16 %v1681
        %v1700 = vunpack.c.h.b16 %v1681
        %v1701 = vunpack.c.l.b16 %v1682
        %v1702 = vunpack.c.h.b16 %v1682
        %v1703 = vunpack.c.l.b16 %v1683
        %v1704 = vunpack.c.h.b16 %v1683
        %v1705 = vunpack.c.l.b16 %v1684
        %v1706 = vunpack.c.h.b16 %v1684
        %v1707 = vunpack.c.l.b16 %v1685
        %v1708 = vunpack.c.h.b16 %v1685
        %v1709 = vunpack.c.l.b16 %v1686
        %v1710 = vunpack.c.h.b16 %v1686
        %v1711 = vpack.c.b16 %v1695, %v1695
        %v1712 = vpack.c.b16 %v1696, %v1696
        %v1713 = vpack.c.b16 %v1697, %v1697
        %v1714 = vpack.c.b16 %v1698, %v1698
        %v1715 = vpack.c.b16 %v1699, %v1699
        %v1716 = vpack.c.b16 %v1700, %v1700
        %v1717 = vpack.c.b16 %v1701, %v1701
        %v1718 = vpack.c.b16 %v1702, %v1702
        %v1719 = vpack.c.b16 %v1703, %v1703
        %v1720 = vpack.c.b16 %v1704, %v1704
        %v1721 = vpack.c.b16 %v1705, %v1705
        %v1722 = vpack.c.b16 %v1706, %v1706
        %v1723 = vpack.c.b16 %v1707, %v1707
        %v1724 = vpack.c.b16 %v1708, %v1708
        %v1725 = vpack.c.b16 %v1709, %v1709
        %v1726 = vpack.c.b16 %v1710, %v1710
        %s1743 = scalar_lea.vmem %s303, 64 [#allocation9]
        %1744 = vst [vmem:[%s1743] sm:$0xf] %v1711
        %1745 = vst [vmem:[%s1743 + $0x4] sm:$0xf] %v1712
        %1746 = vst [vmem:[%s1743 + $0x8] sm:$0xf] %v1713
        %1747 = vst [vmem:[%s1743 + $0xc] sm:$0xf] %v1714
        %1748 = vst [vmem:[%s1743 + $0x10] sm:$0xf] %v1715
        %1749 = vst [vmem:[%s1743 + $0x14] sm:$0xf] %v1716
        %1750 = vst [vmem:[%s1743 + $0x18] sm:$0xf] %v1717
        %1751 = vst [vmem:[%s1743 + $0x1c] sm:$0xf] %v1718
        %1752 = vst [vmem:[%s1743 + $0x20] sm:$0xf] %v1719
        %1753 = vst [vmem:[%s1743 + $0x24] sm:$0xf] %v1720
        %1754 = vst [vmem:[%s1743 + $0x28] sm:$0xf] %v1721
        %1755 = vst [vmem:[%s1743 + $0x2c] sm:$0xf] %v1722
        %1756 = vst [vmem:[%s1743 + $0x30] sm:$0xf] %v1723
        %1757 = vst [vmem:[%s1743 + $0x34] sm:$0xf] %v1724
        %1758 = vst [vmem:[%s1743 + $0x38] sm:$0xf] %v1725
        %1759 = vst [vmem:[%s1743 + $0x3c] sm:$0xf] %v1726
        %v1760 = vpack.c.bf16 %v1286, %v1282
        %v1761 = vpack.c.bf16 %v1296, %v1292
        %v1762 = vpack.c.bf16 %v1306, %v1302
        %v1763 = vpack.c.bf16 %v1316, %v1312
        %v1764 = vpack.c.bf16 %v1326, %v1322
        %v1765 = vpack.c.bf16 %v1336, %v1332
        %v1766 = vpack.c.bf16 %v1346, %v1342
        %v1767 = vpack.c.bf16 %v1356, %v1352
        %v1776 = vunpack.c.l.b16 %v1760
        %v1777 = vunpack.c.h.b16 %v1760
        %v1778 = vunpack.c.l.b16 %v1761
        %v1779 = vunpack.c.h.b16 %v1761
        %v1780 = vunpack.c.l.b16 %v1762
        %v1781 = vunpack.c.h.b16 %v1762
        %v1782 = vunpack.c.l.b16 %v1763
        %v1783 = vunpack.c.h.b16 %v1763
        %v1784 = vunpack.c.l.b16 %v1764
        %v1785 = vunpack.c.h.b16 %v1764
        %v1786 = vunpack.c.l.b16 %v1765
        %v1787 = vunpack.c.h.b16 %v1765
        %v1788 = vunpack.c.l.b16 %v1766
        %v1789 = vunpack.c.h.b16 %v1766
        %v1790 = vunpack.c.l.b16 %v1767
        %v1791 = vunpack.c.h.b16 %v1767
        %v1792 = vpack.c.b16 %v1776, %v1776
        %v1793 = vpack.c.b16 %v1777, %v1777
        %v1794 = vpack.c.b16 %v1778, %v1778
        %v1795 = vpack.c.b16 %v1779, %v1779
        %v1796 = vpack.c.b16 %v1780, %v1780
        %v1797 = vpack.c.b16 %v1781, %v1781
        %v1798 = vpack.c.b16 %v1782, %v1782
        %v1799 = vpack.c.b16 %v1783, %v1783
        %v1800 = vpack.c.b16 %v1784, %v1784
        %v1801 = vpack.c.b16 %v1785, %v1785
        %v1802 = vpack.c.b16 %v1786, %v1786
        %v1803 = vpack.c.b16 %v1787, %v1787
        %v1804 = vpack.c.b16 %v1788, %v1788
        %v1805 = vpack.c.b16 %v1789, %v1789
        %v1806 = vpack.c.b16 %v1790, %v1790
        %v1807 = vpack.c.b16 %v1791, %v1791
        %s1824 = scalar_lea.vmem %s310, 64 [#allocation11]
        %1825 = vst [vmem:[%s1824] sm:$0xf] %v1792
        %1826 = vst [vmem:[%s1824 + $0x4] sm:$0xf] %v1793
        %1827 = vst [vmem:[%s1824 + $0x8] sm:$0xf] %v1794
        %1828 = vst [vmem:[%s1824 + $0xc] sm:$0xf] %v1795
        %1829 = vst [vmem:[%s1824 + $0x10] sm:$0xf] %v1796
        %1830 = vst [vmem:[%s1824 + $0x14] sm:$0xf] %v1797
        %1831 = vst [vmem:[%s1824 + $0x18] sm:$0xf] %v1798
        %1832 = vst [vmem:[%s1824 + $0x1c] sm:$0xf] %v1799
        %1833 = vst [vmem:[%s1824 + $0x20] sm:$0xf] %v1800
        %1834 = vst [vmem:[%s1824 + $0x24] sm:$0xf] %v1801
        %1835 = vst [vmem:[%s1824 + $0x28] sm:$0xf] %v1802
        %1836 = vst [vmem:[%s1824 + $0x2c] sm:$0xf] %v1803
        %1837 = vst [vmem:[%s1824 + $0x30] sm:$0xf] %v1804
        %1838 = vst [vmem:[%s1824 + $0x34] sm:$0xf] %v1805
        %1839 = vst [vmem:[%s1824 + $0x38] sm:$0xf] %v1806
        %1840 = vst [vmem:[%s1824 + $0x3c] sm:$0xf] %v1807
        %s1841 = sand.u32 %s119, 1
        %s1842 = scalar_lea.sflag [#allocation4], %s1841
        %s1843 = sand.u32 %s119, 1
        %s1844 = smul.addr %s1843, 128
        %s1845 = scalar_lea.vmem [#allocation8], %s1844
        %s1846 = sand.u32 %s27, 1
        %s1847 = scalar_lea.sflag [#allocation10], %s1846
        %s1848 = sand.u32 %s147, 1
        %s1849 = smul.addr %s1848, 128
        %s1850 = scalar_lea.vmem [#allocation9], %s1849
        %s1851 = sand.u32 %s27, 1
        %s1852 = scalar_lea.sflag [#allocation10], %s1851
        %s1853 = sand.u32 %s175, 1
        %s1854 = smul.addr %s1853, 128
        %s1855 = scalar_lea.vmem [#allocation11], %s1854
        // Predicated region
        $region45: #{tpu_custom_call.1} parent=31 // pred_check
          %p1856 = pneg %p129
        $region46: #{tpu_custom_call.1} parent=31 // pred_check_branch
          %1858 = sbr.rel (%p1856) target = $region48
        $region47: #{tpu_custom_call.1} parent=31 // pred_region
          #allocation13 [shape = 'u32[6]{0}', space=smem, size = 0x18, scoped, tag = 'DMA stride descriptor']
          %s1859 = smul.u32 16, %s32
          %s1861 = ssub.s32 2048, 2048
          %1862 = vsyncadd %s1842, %s1861
          %s1863 = smul.addr %s31, 128
          %s1864 = sadd.s32 %s1859, %s1863
          %s1865 = smul.addr %s1864, 64
          %s1866 = scalar_lea.hbm %s3, %s1865
          %s1868 = sshll.u32 1, 14
          %s1869 = sxor.u32 4294967295, %s1868
          %s1872 = sshll.u32 7, 18
          %s1873 = sxor.u32 4294967295, %s1872
          %s1874 = sand.u32 0, %s1873
          %s1876 = sor.u32 %s1874, 0
          %s1878 = sshll.u32 3, 24
          %s1879 = sxor.u32 4294967295, %s1878
          %s1880 = sand.u32 %s1876, %s1879
          %s1882 = sor.u32 %s1880, 0
          %s1883 = sshll.u32 %s1845, 4
          %s1884 = int_to_ptr.vmem [resolvable:$true] %s1883
          %1890 = sst [smem:[#allocation13]] 1024
          %s1891 = scalar_lea.smem [#allocation13], 1
          %1892 = sst [smem:[%s1891]] 4096
          %s1893 = scalar_lea.smem [#allocation13], 2
          %1894 = sst [smem:[%s1893]] 16
          %s1895 = scalar_lea.smem [#allocation13], 3
          %1896 = sst [smem:[%s1895]] 64
          %s1897 = scalar_lea.smem [#allocation13], 4
          %1898 = sst [smem:[%s1897]] 64
          %s1899 = scalar_lea.smem [#allocation13], 5
          %1900 = sst [smem:[%s1899]] 4
          %1902 = dma.general %s1884, 2048, %s1866, %s1842, [#allocation12], [#allocation13], %s1882, 0
        $region48: #{tpu_custom_call.1} parent=31 // pred_fallthru
          _
        // Predicated region
        $region49: #{tpu_custom_call.1} parent=31 // pred_check
          %p1903 = pneg %p157
        $region50: #{tpu_custom_call.1} parent=31 // pred_check_branch
          %1905 = sbr.rel (%p1903) target = $region52
        $region51: #{tpu_custom_call.1} parent=31 // pred_region
          #allocation15 [shape = 'u32[6]{0}', space=smem, size = 0x18, scoped, tag = 'DMA stride descriptor']
          %s1906 = smul.u32 16, %s32
          %s1908 = ssub.s32 2048, 2048
          %1909 = vsyncadd %s1847, %s1908
          %s1910 = smul.addr %s31, 128
          %s1911 = sadd.s32 %s1906, %s1910
          %s1912 = smul.addr %s1911, 64
          %s1913 = scalar_lea.hbm %s4, %s1912
          %s1915 = sshll.u32 1, 14
          %s1916 = sxor.u32 4294967295, %s1915
          %s1919 = sshll.u32 7, 18
          %s1920 = sxor.u32 4294967295, %s1919
          %s1921 = sand.u32 0, %s1920
          %s1923 = sor.u32 %s1921, 0
          %s1925 = sshll.u32 3, 24
          %s1926 = sxor.u32 4294967295, %s1925
          %s1927 = sand.u32 %s1923, %s1926
          %s1929 = sor.u32 %s1927, 0
          %s1930 = sshll.u32 %s1850, 4
          %s1931 = int_to_ptr.vmem [resolvable:$true] %s1930
          %1937 = sst [smem:[#allocation15]] 1024
          %s1938 = scalar_lea.smem [#allocation15], 1
          %1939 = sst [smem:[%s1938]] 4096
          %s1940 = scalar_lea.smem [#allocation15], 2
          %1941 = sst [smem:[%s1940]] 16
          %s1942 = scalar_lea.smem [#allocation15], 3
          %1943 = sst [smem:[%s1942]] 64
          %s1944 = scalar_lea.smem [#allocation15], 4
          %1945 = sst [smem:[%s1944]] 64
          %s1946 = scalar_lea.smem [#allocation15], 5
          %1947 = sst [smem:[%s1946]] 4
          %1949 = dma.general %s1931, 2048, %s1913, %s1847, [#allocation14], [#allocation15], %s1929, 0
        $region52: #{tpu_custom_call.1} parent=31 // pred_fallthru
          _
        // Predicated region
        $region53: #{tpu_custom_call.1} parent=31 // pred_check
          %p1950 = pneg %p185
        $region54: #{tpu_custom_call.1} parent=31 // pred_check_branch
          %1952 = sbr.rel (%p1950) target = $region56
        $region55: #{tpu_custom_call.1} parent=31 // pred_region
          #allocation17 [shape = 'u32[6]{0}', space=smem, size = 0x18, scoped, tag = 'DMA stride descriptor']
          %s1953 = smul.u32 16, %s32
          %s1955 = ssub.s32 2048, 2048
          %1956 = vsyncadd %s1852, %s1955
          %s1957 = smul.addr %s31, 128
          %s1958 = sadd.s32 %s1953, %s1957
          %s1959 = smul.addr %s1958, 64
          %s1960 = scalar_lea.hbm %s5, %s1959
          %s1962 = sshll.u32 1, 14
          %s1963 = sxor.u32 4294967295, %s1962
          %s1966 = sshll.u32 7, 18
          %s1967 = sxor.u32 4294967295, %s1966
          %s1968 = sand.u32 0, %s1967
          %s1970 = sor.u32 %s1968, 0
          %s1972 = sshll.u32 3, 24
          %s1973 = sxor.u32 4294967295, %s1972
          %s1974 = sand.u32 %s1970, %s1973
          %s1976 = sor.u32 %s1974, 0
          %s1977 = sshll.u32 %s1855, 4
          %s1978 = int_to_ptr.vmem [resolvable:$true] %s1977
          %1984 = sst [smem:[#allocation17]] 1024
          %s1985 = scalar_lea.smem [#allocation17], 1
          %1986 = sst [smem:[%s1985]] 4096
          %s1987 = scalar_lea.smem [#allocation17], 2
          %1988 = sst [smem:[%s1987]] 16
          %s1989 = scalar_lea.smem [#allocation17], 3
          %1990 = sst [smem:[%s1989]] 64
          %s1991 = scalar_lea.smem [#allocation17], 4
          %1992 = sst [smem:[%s1991]] 64
          %s1993 = scalar_lea.smem [#allocation17], 5
          %1994 = sst [smem:[%s1993]] 4
          %1996 = dma.general %s1978, 2048, %s1960, %s1852, [#allocation16], [#allocation17], %s1976, 0
        $region56: #{tpu_custom_call.1} parent=31 // pred_fallthru
          _
      $region32: #{tpu_custom_call.1} parent=5 // pred_fallthru
        _
      %p1997 = scmp.le.s32.totalorder 2, %s22
      // Predicated region
      $region57: #{tpu_custom_call.1} parent=5 // pred_check
        %p1998 = pneg %p1997
      $region58: #{tpu_custom_call.1} parent=5 // pred_check_branch
        %2000 = sbr.rel (%p1998) target = $region60
      $region59: #{tpu_custom_call.1} parent=5 // pred_region
        %s2001 = ssub.s32 %s22, 2
        // Predicated region
        $region61: #{tpu_custom_call.1} parent=59 // pred_check
          %p2002 = pneg %p135
        $region62: #{tpu_custom_call.1} parent=59 // pred_check_branch
          %2004 = sbr.rel (%p2002) target = $region64
        $region63: #{tpu_custom_call.1} parent=59 // pred_region
          %s2005 = sand.u32 %s120, 1
          %s2006 = scalar_lea.sflag [#allocation4], %s2005
          %s2007 = sand.u32 %s120, 1
          %s2008 = smul.addr %s2007, 128
          %s2009 = scalar_lea.vmem [#allocation8], %s2008
          %2010 = dma.done %s2006, 2048
        $region64: #{tpu_custom_call.1} parent=59 // pred_fallthru
          _
        // Predicated region
        $region65: #{tpu_custom_call.1} parent=59 // pred_check
          %p2011 = pneg %p163
        $region66: #{tpu_custom_call.1} parent=59 // pred_check_branch
          %2013 = sbr.rel (%p2011) target = $region68
        $region67: #{tpu_custom_call.1} parent=59 // pred_region
          %s2014 = sand.u32 %s28, 1
          %s2015 = scalar_lea.sflag [#allocation10], %s2014
          %s2016 = sand.u32 %s148, 1
          %s2017 = smul.addr %s2016, 128
          %s2018 = scalar_lea.vmem [#allocation9], %s2017
          %2019 = dma.done %s2015, 2048
        $region68: #{tpu_custom_call.1} parent=59 // pred_fallthru
          _
        // Predicated region
        $region69: #{tpu_custom_call.1} parent=59 // pred_check
          %p2020 = pneg %p191
        $region70: #{tpu_custom_call.1} parent=59 // pred_check_branch
          %2022 = sbr.rel (%p2020) target = $region72
        $region71: #{tpu_custom_call.1} parent=59 // pred_region
          %s2023 = sand.u32 %s28, 1
          %s2024 = scalar_lea.sflag [#allocation10], %s2023
          %s2025 = sand.u32 %s176, 1
          %s2026 = smul.addr %s2025, 128
          %s2027 = scalar_lea.vmem [#allocation11], %s2026
          %2028 = dma.done %s2024, 2048
        $region72: #{tpu_custom_call.1} parent=59 // pred_fallthru
          _
      $region60: #{tpu_custom_call.1} parent=5 // pred_fallthru
        _
    $region6: #{tpu_custom_call.1} parent=1 // loop_footer
      %s26 = sadd.s32 1, %s22
    $region7: #{tpu_custom_call.1} parent=1 // loop_footer_branch
      %21 = sbr.rel target = $region3
    $region8: #{tpu_custom_call.1} parent=1 // loop_exit
      _
    %2029 = vsyncpa [#allocation3], 1
    %s2030 = scalar_lea.sflag [#allocation3], 1
    %2031 = vsyncpa %s2030, 1
    %2032 = vsyncpa [#allocation6], 1
    %2033 = vsyncpa [#allocation4], 1
    %s2034 = scalar_lea.sflag [#allocation4], 1
    %2035 = vsyncpa %s2034, 1
    %2036 = vsyncpa [#allocation10], 1
    %s2037 = scalar_lea.sflag [#allocation10], 1
    %2038 = vsyncpa %s2037, 1

</llo_original>
